<compile_context>
chip_gen: v7x
topology: tpu7x:2x2x1
jax: 0.10.0
libtpu: 0.0.40
codegen_flags: <defaults>
</compile_context>

<pallas_src>
import functools

import jax
import jax.numpy as jnp
from jax import lax
from jax.experimental import pallas as pl
from jax.experimental.pallas import tpu as pltpu

BN_EPS = 1e-5


def _conv_parities(x_ref, w_ref, *, H, W, Cin, Cout):
    """Transposed conv (k=4, s=2, p=1) for one image, parity-folded output.

    x_ref: (H+2, W+2, Cin) zero-padded input (bf16/f32).
    w_ref: (16, Cin, Cout) kernel taps, index = kh*4 + kw.
    Returns f32 (H*W, 4*Cout); columns parity-major, parity p = 2*ph + pw,
    i.e. output pixel (2h+ph, 2w+pw, c) lives at row h*W+w, col p*Cout+c.
    """
    # Load each of the 9 shifted (H, W, Cin) views exactly once.
    shifted = {}
    for r in range(3):
        for c in range(3):
            shifted[(r, c)] = x_ref[r:r + H, c:c + W, :].reshape(H * W, Cin)

    cols = []
    for ph in range(2):
        for pw in range(2):
            acc = None
            for a in range(2):
                for b in range(2):
                    kh = 3 - 2 * a - ph
                    kw = 3 - 2 * b - pw
                    y = jnp.dot(
                        shifted[(a + ph, b + pw)],
                        w_ref[kh * 4 + kw],
                        preferred_element_type=jnp.float32,
                    )
                    acc = y if acc is None else acc + y
            cols.append(acc)
    return jnp.concatenate(cols, axis=1)  # (H*W, 4*Cout), f32


def _stats_kernel(x_ref, w_ref, sum_ref, sq_ref, *, H, W, Cin, Cout):
    """Pass 1: per-image partial BN statistics (no activation writeback)."""
    y = _conv_parities(x_ref, w_ref, H=H, W=W, Cin=Cin, Cout=Cout)
    sum_ref[...] = jnp.sum(y, axis=0, keepdims=True)
    sq_ref[...] = jnp.sum(y * y, axis=0, keepdims=True)


def _apply_kernel(x_ref, w_ref, scale_ref, bias_ref, o_ref, *, H, W, Cin, Cout):
    """Pass 2: recompute conv, fused BN affine (scale*y + bias) + ReLU."""
    y = _conv_parities(x_ref, w_ref, H=H, W=W, Cin=Cin, Cout=Cout)
    o_ref[...] = jnp.maximum(y * scale_ref[...] + bias_ref[...], 0.0)


def unet_up_forward(x_nchw, skip_nchw, weight, gamma, beta,
                    compute_dtype=jnp.bfloat16):
    """x_nchw: (N, Cin, H, W); skip_nchw: (N, Cs, 2H, 2W);
    weight: (Cin, Cout, 4, 4) [PyTorch ConvTranspose2d layout]; gamma/beta: (Cout,)."""
    N, Cin, H, W = x_nchw.shape
    Cout = weight.shape[1]
    C4 = 4 * Cout
    M_total = N * 4 * H * W  # = N * (2H) * (2W)

    # Channels-last (lane dense) + 1-pixel zero pad; bf16 halves DMA/VMEM bytes.
    x = jnp.transpose(x_nchw, (0, 2, 3, 1)).astype(compute_dtype)
    x_pad = jnp.pad(x, ((0, 0), (1, 1), (1, 1), (0, 0)))
    # (Cin, Cout, kh, kw) -> (kh*4+kw, Cin, Cout)
    w_taps = jnp.transpose(weight, (2, 3, 0, 1)).reshape(16, Cin, Cout)
    w_taps = w_taps.astype(compute_dtype)

    conv_flops = 2 * N * H * W * (4 * Cin) * (4 * Cout)
    in_bytes = (x_pad.size * x_pad.dtype.itemsize
                + w_taps.size * w_taps.dtype.itemsize)

    grid = (N,)
    x_spec = pl.BlockSpec((None, H + 2, W + 2, Cin), lambda n: (n, 0, 0, 0))
    w_spec = pl.BlockSpec((16, Cin, Cout), lambda n: (0, 0, 0))
    cparams = pltpu.CompilerParams(
        dimension_semantics=("parallel",),           # megacore-shard over images
        vmem_limit_bytes=32 * 1024 * 1024,           # explicit, safe on v5e/v6e/v7x
    )

    # ---- Pass 1: partial BN statistics per image -----------------------------
    sums, sqs = pl.pallas_call(
        functools.partial(_stats_kernel, H=H, W=W, Cin=Cin, Cout=Cout),
        out_shape=(jax.ShapeDtypeStruct((N, 1, C4), jnp.float32),
                   jax.ShapeDtypeStruct((N, 1, C4), jnp.float32)),
        grid=grid,
        in_specs=[x_spec, w_spec],
        out_specs=(pl.BlockSpec((None, 1, C4), lambda n: (n, 0, 0)),
                   pl.BlockSpec((None, 1, C4), lambda n: (n, 0, 0))),
        compiler_params=cparams,
        cost_estimate=pl.CostEstimate(
            flops=conv_flops, transcendentals=0,
            bytes_accessed=in_bytes + 2 * N * C4 * 4),
    )(x_pad, w_taps)

    # ---- Tiny glue: fold stats into a per-channel fused scale / bias ---------
    sum_c = jnp.sum(sums, axis=(0, 1)).reshape(4, Cout).sum(axis=0)
    sq_c = jnp.sum(sqs, axis=(0, 1)).reshape(4, Cout).sum(axis=0)
    mean = sum_c / M_total
    var = jnp.maximum(sq_c / M_total - mean * mean, 0.0)   # biased var, clamped
    inv = lax.rsqrt(var + BN_EPS)
    scale = gamma.astype(jnp.float32) * inv
    bias = beta.astype(jnp.float32) - mean * scale
    scale4 = jnp.tile(scale, 4).reshape(1, C4)              # parity-major columns
    bias4 = jnp.tile(bias, 4).reshape(1, C4)

    # ---- Pass 2: recompute conv + fused normalize + ReLU, single HBM write ---
    y_flat = pl.pallas_call(
        functools.partial(_apply_kernel, H=H, W=W, Cin=Cin, Cout=Cout),
        out_shape=jax.ShapeDtypeStruct((N, H * W, C4), jnp.float32),
        grid=grid,
        in_specs=[x_spec, w_spec,
                  pl.BlockSpec((1, C4), lambda n: (0, 0)),
                  pl.BlockSpec((1, C4), lambda n: (0, 0))],
        out_specs=pl.BlockSpec((None, H * W, C4), lambda n: (n, 0, 0)),
        compiler_params=cparams,
        cost_estimate=pl.CostEstimate(
            flops=conv_flops, transcendentals=0,
            bytes_accessed=in_bytes + N * H * W * C4 * 4),
    )(x_pad, w_taps, scale4, bias4)

    # Un-fold parities -> NCHW with a single transpose, then channel concat.
    y = y_flat.reshape(N, H, W, 2, 2, Cout)                 # (n, h, w, ph, pw, c)
    y = jnp.transpose(y, (0, 5, 1, 3, 2, 4)).reshape(N, Cout, 2 * H, 2 * W)
    return jnp.concatenate([y, skip_nchw.astype(y.dtype)], axis=1)


def unet_up_reference(x, skip, weight, gamma, beta):
    """Pure-JAX (f32) reference of the PyTorch forward (training-mode BatchNorm)."""
    w_conv = jnp.transpose(weight, (1, 0, 2, 3))[:, :, ::-1, ::-1]  # (Cout,Cin,kh,kw) flipped
    y = lax.conv_general_dilated(
        x.astype(jnp.float32), w_conv.astype(jnp.float32),
        window_strides=(1, 1), padding=[(2, 2), (2, 2)], lhs_dilation=(2, 2),
        dimension_numbers=("NCHW", "OIHW", "NCHW"))
    mean = jnp.mean(y, axis=(0, 2, 3), keepdims=True)
    var = jnp.mean((y - mean) ** 2, axis=(0, 2, 3), keepdims=True)
    y = (y - mean) / jnp.sqrt(var + BN_EPS) * gamma.reshape(1, -1, 1, 1) \
        + beta.reshape(1, -1, 1, 1)
    y = jnp.maximum(y, 0.0)
    return jnp.concatenate([y, skip.astype(jnp.float32)], axis=1)


if __name__ == "__main__":
    key = jax.random.PRNGKey(0)
    k1, k2, k3, k4, k5 = jax.random.split(key, 5)

    N, in_size, out_size, H, W = 2, 8, 8, 8, 8
    x = jax.random.normal(k1, (N, in_size, H, W), dtype=jnp.float32)
    skip_input = jax.random.normal(k2, (N, out_size, 2 * H, 2 * W), dtype=jnp.float32)
    # ConvTranspose2d weight layout: (in_channels, out_channels, kH, kW), no bias.
    weight = 0.1 * jax.random.normal(k3, (in_size, out_size, 4, 4), dtype=jnp.float32)
    gamma = 1.0 + 0.1 * jax.random.normal(k4, (out_size,), dtype=jnp.float32)
    beta = 0.1 * jax.random.normal(k5, (out_size,), dtype=jnp.float32)

    out = jax.block_until_ready(unet_up_forward(x, skip_input, weight, gamma, beta))
    ref = jax.block_until_ready(unet_up_reference(x, skip_input, weight, gamma, beta))

    assert out.shape == (N, 2 * out_size, 2 * H, 2 * W), out.shape
    # Tolerance accounts for bf16 matmul inputs vs the f32 reference.
    assert jnp.allclose(out, ref, atol=5e-2, rtol=5e-2), \
        float(jnp.max(jnp.abs(out - ref)))
    print("KERNEL_OK")
</pallas_src>

<mosaic_0001>
module attributes {stable_mosaic.version = 11 : i64} {
  func.func @_stats_kernel(%arg0: i32, %arg1: memref<1x10x10x8xbf16, #tpu.memory_space<vmem>>, %arg2: memref<16x8x8xbf16, #tpu.memory_space<vmem>>, %arg3: memref<1x1x32xf32, #tpu.memory_space<vmem>>, %arg4: memref<1x1x32xf32, #tpu.memory_space<vmem>>) attributes {dimension_semantics = [#tpu.dimension_semantics<parallel>], iteration_bounds = array<i64: 2>, scalar_prefetch = 0 : i64, scratch_operands = 0 : i64, tpu.core_type = #tpu.core_type<tc>, window_params = [{transform_indices = @transform_0, window_bounds = array<i64: 1, 10, 10, 8>}, {pipeline_mode = #tpu.pipeline_mode<synchronous>, transform_indices = @transform_1, window_bounds = array<i64: 16, 8, 8>}, {transform_indices = @transform_2, window_bounds = array<i64: 1, 1, 32>}, {transform_indices = @transform_3, window_bounds = array<i64: 1, 1, 32>}]} {
    %c0 = arith.constant 0 : index
    %c0_0 = arith.constant 0 : index
    %c0_1 = arith.constant 0 : index
    %c0_2 = arith.constant 0 : index
    %0 = vector.load %arg1[%c0, %c0_0, %c0_1, %c0_2] : memref<1x10x10x8xbf16, #tpu.memory_space<vmem>>, vector<1x8x8x8xbf16>
    %1 = vector.shape_cast %0 : vector<1x8x8x8xbf16> to vector<8x8x8xbf16>
    %2 = vector.shape_cast %1 : vector<8x8x8xbf16> to vector<64x8xbf16>
    %c0_3 = arith.constant 0 : index
    %c0_4 = arith.constant 0 : index
    %c1 = arith.constant 1 : index
    %c0_5 = arith.constant 0 : index
    %3 = vector.load %arg1[%c0_3, %c0_4, %c1, %c0_5] : memref<1x10x10x8xbf16, #tpu.memory_space<vmem>>, vector<1x8x8x8xbf16>
    %4 = vector.shape_cast %3 : vector<1x8x8x8xbf16> to vector<8x8x8xbf16>
    %5 = vector.shape_cast %4 : vector<8x8x8xbf16> to vector<64x8xbf16>
    %c0_6 = arith.constant 0 : index
    %c0_7 = arith.constant 0 : index
    %c2 = arith.constant 2 : index
    %c0_8 = arith.constant 0 : index
    %6 = vector.load %arg1[%c0_6, %c0_7, %c2, %c0_8] : memref<1x10x10x8xbf16, #tpu.memory_space<vmem>>, vector<1x8x8x8xbf16>
    %7 = vector.shape_cast %6 : vector<1x8x8x8xbf16> to vector<8x8x8xbf16>
    %8 = vector.shape_cast %7 : vector<8x8x8xbf16> to vector<64x8xbf16>
    %c0_9 = arith.constant 0 : index
    %c1_10 = arith.constant 1 : index
    %c0_11 = arith.constant 0 : index
    %c0_12 = arith.constant 0 : index
    %9 = vector.load %arg1[%c0_9, %c1_10, %c0_11, %c0_12] : memref<1x10x10x8xbf16, #tpu.memory_space<vmem>>, vector<1x8x8x8xbf16>
    %10 = vector.shape_cast %9 : vector<1x8x8x8xbf16> to vector<8x8x8xbf16>
    %11 = vector.shape_cast %10 : vector<8x8x8xbf16> to vector<64x8xbf16>
    %c0_13 = arith.constant 0 : index
    %c1_14 = arith.constant 1 : index
    %c1_15 = arith.constant 1 : index
    %c0_16 = arith.constant 0 : index
    %12 = vector.load %arg1[%c0_13, %c1_14, %c1_15, %c0_16] : memref<1x10x10x8xbf16, #tpu.memory_space<vmem>>, vector<1x8x8x8xbf16>
    %13 = vector.shape_cast %12 : vector<1x8x8x8xbf16> to vector<8x8x8xbf16>
    %14 = vector.shape_cast %13 : vector<8x8x8xbf16> to vector<64x8xbf16>
    %c0_17 = arith.constant 0 : index
    %c1_18 = arith.constant 1 : index
    %c2_19 = arith.constant 2 : index
    %c0_20 = arith.constant 0 : index
    %15 = vector.load %arg1[%c0_17, %c1_18, %c2_19, %c0_20] : memref<1x10x10x8xbf16, #tpu.memory_space<vmem>>, vector<1x8x8x8xbf16>
    %16 = vector.shape_cast %15 : vector<1x8x8x8xbf16> to vector<8x8x8xbf16>
    %17 = vector.shape_cast %16 : vector<8x8x8xbf16> to vector<64x8xbf16>
    %c0_21 = arith.constant 0 : index
    %c2_22 = arith.constant 2 : index
    %c0_23 = arith.constant 0 : index
    %c0_24 = arith.constant 0 : index
    %18 = vector.load %arg1[%c0_21, %c2_22, %c0_23, %c0_24] : memref<1x10x10x8xbf16, #tpu.memory_space<vmem>>, vector<1x8x8x8xbf16>
    %19 = vector.shape_cast %18 : vector<1x8x8x8xbf16> to vector<8x8x8xbf16>
    %20 = vector.shape_cast %19 : vector<8x8x8xbf16> to vector<64x8xbf16>
    %c0_25 = arith.constant 0 : index
    %c2_26 = arith.constant 2 : index
    %c1_27 = arith.constant 1 : index
    %c0_28 = arith.constant 0 : index
    %21 = vector.load %arg1[%c0_25, %c2_26, %c1_27, %c0_28] : memref<1x10x10x8xbf16, #tpu.memory_space<vmem>>, vector<1x8x8x8xbf16>
    %22 = vector.shape_cast %21 : vector<1x8x8x8xbf16> to vector<8x8x8xbf16>
    %23 = vector.shape_cast %22 : vector<8x8x8xbf16> to vector<64x8xbf16>
    %c0_29 = arith.constant 0 : index
    %c2_30 = arith.constant 2 : index
    %c2_31 = arith.constant 2 : index
    %c0_32 = arith.constant 0 : index
    %24 = vector.load %arg1[%c0_29, %c2_30, %c2_31, %c0_32] : memref<1x10x10x8xbf16, #tpu.memory_space<vmem>>, vector<1x8x8x8xbf16>
    %25 = vector.shape_cast %24 : vector<1x8x8x8xbf16> to vector<8x8x8xbf16>
    %26 = vector.shape_cast %25 : vector<8x8x8xbf16> to vector<64x8xbf16>
    %c15 = arith.constant 15 : index
    %c0_33 = arith.constant 0 : index
    %c0_34 = arith.constant 0 : index
    %27 = vector.load %arg2[%c15, %c0_33, %c0_34] : memref<16x8x8xbf16, #tpu.memory_space<vmem>>, vector<1x8x8xbf16>
    %28 = vector.shape_cast %27 : vector<1x8x8xbf16> to vector<8x8xbf16>
    %cst = arith.constant dense<0.000000e+00> : vector<64x8xf32>
    %29 = tpu.matmul %2, %28, %cst {dimension_numbers = #tpu.dot_dimension_numbers<[1], [0], [0], [1], [0, 0, 1, 1], [], []>} : vector<64x8xbf16>, vector<8x8xbf16>, vector<64x8xf32> -> vector<64x8xf32>
    %c13 = arith.constant 13 : index
    %c0_35 = arith.constant 0 : index
    %c0_36 = arith.constant 0 : index
    %30 = vector.load %arg2[%c13, %c0_35, %c0_36] : memref<16x8x8xbf16, #tpu.memory_space<vmem>>, vector<1x8x8xbf16>
    %31 = vector.shape_cast %30 : vector<1x8x8xbf16> to vector<8x8xbf16>
    %cst_37 = arith.constant dense<0.000000e+00> : vector<64x8xf32>
    %32 = tpu.matmul %5, %31, %cst_37 {dimension_numbers = #tpu.dot_dimension_numbers<[1], [0], [0], [1], [0, 0, 1, 1], [], []>} : vector<64x8xbf16>, vector<8x8xbf16>, vector<64x8xf32> -> vector<64x8xf32>
    %33 = arith.addf %29, %32 : vector<64x8xf32>
    %c7 = arith.constant 7 : index
    %c0_38 = arith.constant 0 : index
    %c0_39 = arith.constant 0 : index
    %34 = vector.load %arg2[%c7, %c0_38, %c0_39] : memref<16x8x8xbf16, #tpu.memory_space<vmem>>, vector<1x8x8xbf16>
    %35 = vector.shape_cast %34 : vector<1x8x8xbf16> to vector<8x8xbf16>
    %cst_40 = arith.constant dense<0.000000e+00> : vector<64x8xf32>
    %36 = tpu.matmul %11, %35, %cst_40 {dimension_numbers = #tpu.dot_dimension_numbers<[1], [0], [0], [1], [0, 0, 1, 1], [], []>} : vector<64x8xbf16>, vector<8x8xbf16>, vector<64x8xf32> -> vector<64x8xf32>
    %37 = arith.addf %33, %36 : vector<64x8xf32>
    %c5 = arith.constant 5 : index
    %c0_41 = arith.constant 0 : index
    %c0_42 = arith.constant 0 : index
    %38 = vector.load %arg2[%c5, %c0_41, %c0_42] : memref<16x8x8xbf16, #tpu.memory_space<vmem>>, vector<1x8x8xbf16>
    %39 = vector.shape_cast %38 : vector<1x8x8xbf16> to vector<8x8xbf16>
    %cst_43 = arith.constant dense<0.000000e+00> : vector<64x8xf32>
    %40 = tpu.matmul %14, %39, %cst_43 {dimension_numbers = #tpu.dot_dimension_numbers<[1], [0], [0], [1], [0, 0, 1, 1], [], []>} : vector<64x8xbf16>, vector<8x8xbf16>, vector<64x8xf32> -> vector<64x8xf32>
    %41 = arith.addf %37, %40 : vector<64x8xf32>
    %c14 = arith.constant 14 : index
    %c0_44 = arith.constant 0 : index
    %c0_45 = arith.constant 0 : index
    %42 = vector.load %arg2[%c14, %c0_44, %c0_45] : memref<16x8x8xbf16, #tpu.memory_space<vmem>>, vector<1x8x8xbf16>
    %43 = vector.shape_cast %42 : vector<1x8x8xbf16> to vector<8x8xbf16>
    %cst_46 = arith.constant dense<0.000000e+00> : vector<64x8xf32>
    %44 = tpu.matmul %5, %43, %cst_46 {dimension_numbers = #tpu.dot_dimension_numbers<[1], [0], [0], [1], [0, 0, 1, 1], [], []>} : vector<64x8xbf16>, vector<8x8xbf16>, vector<64x8xf32> -> vector<64x8xf32>
    %c12 = arith.constant 12 : index
    %c0_47 = arith.constant 0 : index
    %c0_48 = arith.constant 0 : index
    %45 = vector.load %arg2[%c12, %c0_47, %c0_48] : memref<16x8x8xbf16, #tpu.memory_space<vmem>>, vector<1x8x8xbf16>
    %46 = vector.shape_cast %45 : vector<1x8x8xbf16> to vector<8x8xbf16>
    %cst_49 = arith.constant dense<0.000000e+00> : vector<64x8xf32>
    %47 = tpu.matmul %8, %46, %cst_49 {dimension_numbers = #tpu.dot_dimension_numbers<[1], [0], [0], [1], [0, 0, 1, 1], [], []>} : vector<64x8xbf16>, vector<8x8xbf16>, vector<64x8xf32> -> vector<64x8xf32>
    %48 = arith.addf %44, %47 : vector<64x8xf32>
    %c6 = arith.constant 6 : index
    %c0_50 = arith.constant 0 : index
    %c0_51 = arith.constant 0 : index
    %49 = vector.load %arg2[%c6, %c0_50, %c0_51] : memref<16x8x8xbf16, #tpu.memory_space<vmem>>, vector<1x8x8xbf16>
    %50 = vector.shape_cast %49 : vector<1x8x8xbf16> to vector<8x8xbf16>
    %cst_52 = arith.constant dense<0.000000e+00> : vector<64x8xf32>
    %51 = tpu.matmul %14, %50, %cst_52 {dimension_numbers = #tpu.dot_dimension_numbers<[1], [0], [0], [1], [0, 0, 1, 1], [], []>} : vector<64x8xbf16>, vector<8x8xbf16>, vector<64x8xf32> -> vector<64x8xf32>
    %52 = arith.addf %48, %51 : vector<64x8xf32>
    %c4 = arith.constant 4 : index
    %c0_53 = arith.constant 0 : index
    %c0_54 = arith.constant 0 : index
    %53 = vector.load %arg2[%c4, %c0_53, %c0_54] : memref<16x8x8xbf16, #tpu.memory_space<vmem>>, vector<1x8x8xbf16>
    %54 = vector.shape_cast %53 : vector<1x8x8xbf16> to vector<8x8xbf16>
    %cst_55 = arith.constant dense<0.000000e+00> : vector<64x8xf32>
    %55 = tpu.matmul %17, %54, %cst_55 {dimension_numbers = #tpu.dot_dimension_numbers<[1], [0], [0], [1], [0, 0, 1, 1], [], []>} : vector<64x8xbf16>, vector<8x8xbf16>, vector<64x8xf32> -> vector<64x8xf32>
    %56 = arith.addf %52, %55 : vector<64x8xf32>
    %c11 = arith.constant 11 : index
    %c0_56 = arith.constant 0 : index
    %c0_57 = arith.constant 0 : index
    %57 = vector.load %arg2[%c11, %c0_56, %c0_57] : memref<16x8x8xbf16, #tpu.memory_space<vmem>>, vector<1x8x8xbf16>
    %58 = vector.shape_cast %57 : vector<1x8x8xbf16> to vector<8x8xbf16>
    %cst_58 = arith.constant dense<0.000000e+00> : vector<64x8xf32>
    %59 = tpu.matmul %11, %58, %cst_58 {dimension_numbers = #tpu.dot_dimension_numbers<[1], [0], [0], [1], [0, 0, 1, 1], [], []>} : vector<64x8xbf16>, vector<8x8xbf16>, vector<64x8xf32> -> vector<64x8xf32>
    %c9 = arith.constant 9 : index
    %c0_59 = arith.constant 0 : index
    %c0_60 = arith.constant 0 : index
    %60 = vector.load %arg2[%c9, %c0_59, %c0_60] : memref<16x8x8xbf16, #tpu.memory_space<vmem>>, vector<1x8x8xbf16>
    %61 = vector.shape_cast %60 : vector<1x8x8xbf16> to vector<8x8xbf16>
    %cst_61 = arith.constant dense<0.000000e+00> : vector<64x8xf32>
    %62 = tpu.matmul %14, %61, %cst_61 {dimension_numbers = #tpu.dot_dimension_numbers<[1], [0], [0], [1], [0, 0, 1, 1], [], []>} : vector<64x8xbf16>, vector<8x8xbf16>, vector<64x8xf32> -> vector<64x8xf32>
    %63 = arith.addf %59, %62 : vector<64x8xf32>
    %c3 = arith.constant 3 : index
    %c0_62 = arith.constant 0 : index
    %c0_63 = arith.constant 0 : index
    %64 = vector.load %arg2[%c3, %c0_62, %c0_63] : memref<16x8x8xbf16, #tpu.memory_space<vmem>>, vector<1x8x8xbf16>
    %65 = vector.shape_cast %64 : vector<1x8x8xbf16> to vector<8x8xbf16>
    %cst_64 = arith.constant dense<0.000000e+00> : vector<64x8xf32>
    %66 = tpu.matmul %20, %65, %cst_64 {dimension_numbers = #tpu.dot_dimension_numbers<[1], [0], [0], [1], [0, 0, 1, 1], [], []>} : vector<64x8xbf16>, vector<8x8xbf16>, vector<64x8xf32> -> vector<64x8xf32>
    %67 = arith.addf %63, %66 : vector<64x8xf32>
    %c1_65 = arith.constant 1 : index
    %c0_66 = arith.constant 0 : index
    %c0_67 = arith.constant 0 : index
    %68 = vector.load %arg2[%c1_65, %c0_66, %c0_67] : memref<16x8x8xbf16, #tpu.memory_space<vmem>>, vector<1x8x8xbf16>
    %69 = vector.shape_cast %68 : vector<1x8x8xbf16> to vector<8x8xbf16>
    %cst_68 = arith.constant dense<0.000000e+00> : vector<64x8xf32>
    %70 = tpu.matmul %23, %69, %cst_68 {dimension_numbers = #tpu.dot_dimension_numbers<[1], [0], [0], [1], [0, 0, 1, 1], [], []>} : vector<64x8xbf16>, vector<8x8xbf16>, vector<64x8xf32> -> vector<64x8xf32>
    %71 = arith.addf %67, %70 : vector<64x8xf32>
    %c10 = arith.constant 10 : index
    %c0_69 = arith.constant 0 : index
    %c0_70 = arith.constant 0 : index
    %72 = vector.load %arg2[%c10, %c0_69, %c0_70] : memref<16x8x8xbf16, #tpu.memory_space<vmem>>, vector<1x8x8xbf16>
    %73 = vector.shape_cast %72 : vector<1x8x8xbf16> to vector<8x8xbf16>
    %cst_71 = arith.constant dense<0.000000e+00> : vector<64x8xf32>
    %74 = tpu.matmul %14, %73, %cst_71 {dimension_numbers = #tpu.dot_dimension_numbers<[1], [0], [0], [1], [0, 0, 1, 1], [], []>} : vector<64x8xbf16>, vector<8x8xbf16>, vector<64x8xf32> -> vector<64x8xf32>
    %c8 = arith.constant 8 : index
    %c0_72 = arith.constant 0 : index
    %c0_73 = arith.constant 0 : index
    %75 = vector.load %arg2[%c8, %c0_72, %c0_73] : memref<16x8x8xbf16, #tpu.memory_space<vmem>>, vector<1x8x8xbf16>
    %76 = vector.shape_cast %75 : vector<1x8x8xbf16> to vector<8x8xbf16>
    %cst_74 = arith.constant dense<0.000000e+00> : vector<64x8xf32>
    %77 = tpu.matmul %17, %76, %cst_74 {dimension_numbers = #tpu.dot_dimension_numbers<[1], [0], [0], [1], [0, 0, 1, 1], [], []>} : vector<64x8xbf16>, vector<8x8xbf16>, vector<64x8xf32> -> vector<64x8xf32>
    %78 = arith.addf %74, %77 : vector<64x8xf32>
    %c2_75 = arith.constant 2 : index
    %c0_76 = arith.constant 0 : index
    %c0_77 = arith.constant 0 : index
    %79 = vector.load %arg2[%c2_75, %c0_76, %c0_77] : memref<16x8x8xbf16, #tpu.memory_space<vmem>>, vector<1x8x8xbf16>
    %80 = vector.shape_cast %79 : vector<1x8x8xbf16> to vector<8x8xbf16>
    %cst_78 = arith.constant dense<0.000000e+00> : vector<64x8xf32>
    %81 = tpu.matmul %23, %80, %cst_78 {dimension_numbers = #tpu.dot_dimension_numbers<[1], [0], [0], [1], [0, 0, 1, 1], [], []>} : vector<64x8xbf16>, vector<8x8xbf16>, vector<64x8xf32> -> vector<64x8xf32>
    %82 = arith.addf %78, %81 : vector<64x8xf32>
    %c0_79 = arith.constant 0 : index
    %c0_80 = arith.constant 0 : index
    %c0_81 = arith.constant 0 : index
    %83 = vector.load %arg2[%c0_79, %c0_80, %c0_81] : memref<16x8x8xbf16, #tpu.memory_space<vmem>>, vector<1x8x8xbf16>
    %84 = vector.shape_cast %83 : vector<1x8x8xbf16> to vector<8x8xbf16>
    %cst_82 = arith.constant dense<0.000000e+00> : vector<64x8xf32>
    %85 = tpu.matmul %26, %84, %cst_82 {dimension_numbers = #tpu.dot_dimension_numbers<[1], [0], [0], [1], [0, 0, 1, 1], [], []>} : vector<64x8xbf16>, vector<8x8xbf16>, vector<64x8xf32> -> vector<64x8xf32>
    %86 = arith.addf %82, %85 : vector<64x8xf32>
    %87 = tpu.concatenate %41, %56, %71, %86 in 1 : vector<64x8xf32>, vector<64x8xf32>, vector<64x8xf32>, vector<64x8xf32> -> vector<64x32xf32>
    %cst_83 = arith.constant dense<0.000000e+00> : vector<32xf32>
    %88 = vector.multi_reduction <add>, %87, %cst_83 [0] : vector<64x32xf32> to vector<32xf32>
    %89 = vector.shape_cast %88 : vector<32xf32> to vector<1x32xf32>
    %c0_84 = arith.constant 0 : index
    %c0_85 = arith.constant 0 : index
    %c0_86 = arith.constant 0 : index
    %90 = vector.load %arg3[%c0_84, %c0_85, %c0_86] : memref<1x1x32xf32, #tpu.memory_space<vmem>>, vector<1x1x32xf32>
    %91 = vector.shape_cast %90 : vector<1x1x32xf32> to vector<1x32xf32>
    %92 = vector.shape_cast %89 : vector<1x32xf32> to vector<1x1x32xf32>
    tpu.vector_store %arg3[%c0_84, %c0_85, %c0_86], %92 {strides = array<i32>} : memref<1x1x32xf32, #tpu.memory_space<vmem>>, vector<1x1x32xf32>,
    %93 = arith.mulf %87, %87 : vector<64x32xf32>
    %cst_87 = arith.constant dense<0.000000e+00> : vector<32xf32>
    %94 = vector.multi_reduction <add>, %93, %cst_87 [0] : vector<64x32xf32> to vector<32xf32>
    %95 = vector.shape_cast %94 : vector<32xf32> to vector<1x32xf32>
    %c0_88 = arith.constant 0 : index
    %c0_89 = arith.constant 0 : index
    %c0_90 = arith.constant 0 : index
    %96 = vector.load %arg4[%c0_88, %c0_89, %c0_90] : memref<1x1x32xf32, #tpu.memory_space<vmem>>, vector<1x1x32xf32>
    %97 = vector.shape_cast %96 : vector<1x1x32xf32> to vector<1x32xf32>
    %98 = vector.shape_cast %95 : vector<1x32xf32> to vector<1x1x32xf32>
    tpu.vector_store %arg4[%c0_88, %c0_89, %c0_90], %98 {strides = array<i32>} : memref<1x1x32xf32, #tpu.memory_space<vmem>>, vector<1x1x32xf32>,
    return
  }
  func.func @transform_0(%arg0: i32) -> (i32, i32, i32, i32) {
    %c0_i32 = arith.constant 0 : i32
    %c0_i32_0 = arith.constant 0 : i32
    %c0_i32_1 = arith.constant 0 : i32
    %c0_i32_2 = arith.constant 0 : i32
    return %arg0, %c0_i32, %c0_i32_0, %c0_i32_1 : i32, i32, i32, i32
  }
  func.func @transform_1(%arg0: i32) -> (i32, i32, i32) {
    %c0_i32 = arith.constant 0 : i32
    %c0_i32_0 = arith.constant 0 : i32
    %c0_i32_1 = arith.constant 0 : i32
    %c0_i32_2 = arith.constant 0 : i32
    return %c0_i32, %c0_i32_0, %c0_i32_1 : i32, i32, i32
  }
  func.func @transform_2(%arg0: i32) -> (i32, i32, i32) {
    %c0_i32 = arith.constant 0 : i32
    %c0_i32_0 = arith.constant 0 : i32
    %c0_i32_1 = arith.constant 0 : i32
    return %arg0, %c0_i32, %c0_i32_0 : i32, i32, i32
  }
  func.func @transform_3(%arg0: i32) -> (i32, i32, i32) {
    %c0_i32 = arith.constant 0 : i32
    %c0_i32_0 = arith.constant 0 : i32
    %c0_i32_1 = arith.constant 0 : i32
    return %arg0, %c0_i32, %c0_i32_0 : i32, i32, i32
  }
}

</mosaic_0001>

<llo_original>
// kernel: tpu_custom_call.1
$region0: #{tpu_custom_call.1}
  #allocation0 [shape = 'u32[]', space=smem, size = 0x4, offset = 0x4, fixed_abs, tag = 'smem constant byte address 0x4 - core index']
  #allocation1 [shape = 'u32[144,128]{1,0:T(1,128)}', space=vmem, size = 0x12000, scoped, tag = 'internal scratch']
  %s0 = inlined_call_operand.vmem [shape: bf16[2,10,10,8], index: 0, kind: input, shape index: {}]
  %s1 = inlined_call_operand.vmem [shape: bf16[16,8,8], index: 1, kind: input, shape index: {}]
  %s2 = inlined_call_operand.hbm [shape: f32[2,1,32], index: 2, kind: output, shape index: {0}]
  %s3 = inlined_call_operand.hbm [shape: f32[2,1,32], index: 3, kind: output, shape index: {1}]
  %4 = xla_tuple %s2, %s3
  %s5 = sld [smem:[#allocation0]]
  $region49: #{tpu_custom_call.1} parent=0
    _
  %s7 = ssub.s32 1, %s5
  %s8 = scalar_select 0, %s7, %s5
  $region1: #{tpu_custom_call.1} parent=0
    #allocation2 [shape = 'u8[1024]{0}', space=vmem, size = 0x400, scoped, tag = 'output window, operand 0']
    #allocation3 [shape = 's32[2]{0}', space=sflag, size = 0x8, scoped, tag = 'scoped memory for tpu_custom_call.1']
    #allocation4 [shape = 'u8[1024]{0}', space=vmem, size = 0x400, scoped, tag = 'output window, operand 1']
    #allocation5 [shape = 's32[2]{0}', space=sflag, size = 0x8, scoped, tag = 'scoped memory for tpu_custom_call.1']
    %9 = vsyncpa [#allocation3], 0
    %s10 = scalar_lea.sflag [#allocation3], 1
    %11 = vsyncpa %s10, 0
    %12 = vsyncpa [#allocation5], 0
    %s13 = scalar_lea.sflag [#allocation5], 1
    %14 = vsyncpa %s13, 0
    loop: start=0, step=1, limit=4
    $region2: #{tpu_custom_call.1} parent=1 // loop_pre_header
      _
    $region3: #{tpu_custom_call.1} parent=1 // loop_header
      %s16 = sphi 0, %s20
      %p17 = scmp.ge.s32.totalorder %s16, 4
      %s26 = sphi 0, %s28
      %s29 = sphi 0, %s26
      %s30 = sphi 0, %s29
      %s46 = sphi 0, %s30
      %s50 = sphi 0, %s50
      %s52 = sphi 0, %s50
      %s53 = sphi 0, %s52
      %s67 = sphi 0, %s53
      %s73 = sphi 0, %s75
      %s76 = sphi 0, %s73
      %s77 = sphi 0, %s76
      %s93 = sphi 0, %s77
      %s99 = sphi 0, %s101
      %s102 = sphi 0, %s99
      %s103 = sphi 0, %s102
      %s119 = sphi 0, %s103
    $region4: #{tpu_custom_call.1} parent=1 // loop_header_branch
      %19 = sbr.rel (%p17) target = $region8
    $region5: #{tpu_custom_call.1} parent=1 // loop_body
      %s21 = ssub.s32 %s16, 1
      %s22 = ssub.s32 %s16, 2
      %s23 = sadd.s32 %s16, 1
      %s24 = ssub.s32 %s16, %s23
      %p25 = scmp.eq.s32.totalorder %s24, 0
      %s27 = sadd.s32 %s26, 1
      %s28 = scalar_select %p25, %s26, %s27
      %p31 = pneg %p25
      %p32 = scmp.eq.s32.totalorder %s16, 1
      %p33 = por %p31, %p32
      %p34 = scmp.ne.s32.totalorder %s26, %s29
      %p35 = scmp.eq.s32.totalorder %s16, 0
      %p36 = por %p34, %p35
      %p37 = scmp.ne.s32.totalorder %s26, %s29
      %p38 = scmp.eq.s32.totalorder %s21, 1
      %p39 = por %p37, %p38
      %p40 = scmp.ne.s32.totalorder %s29, %s30
      %p41 = scmp.eq.s32.totalorder %s21, 0
      %p42 = por %p40, %p41
      %p43 = scmp.ne.s32.totalorder %s29, %s30
      %p44 = scmp.eq.s32.totalorder %s22, 1
      %p45 = por %p43, %p44
      %p47 = scmp.ne.s32.totalorder %s30, %s46
      %p48 = scmp.eq.s32.totalorder %s22, 0
      %p49 = por %p47, %p48
      %s51 = sadd.s32 %s50, 1
      %p54 = scmp.eq.s32.totalorder %s16, 1
      %p55 = scmp.ne.s32.totalorder %s50, %s52
      %p56 = scmp.eq.s32.totalorder %s16, 0
      %p57 = por %p55, %p56
      %p58 = scmp.ne.s32.totalorder %s50, %s52
      %p59 = scmp.eq.s32.totalorder %s21, 1
      %p60 = por %p58, %p59
      %p61 = scmp.ne.s32.totalorder %s52, %s53
      %p62 = scmp.eq.s32.totalorder %s21, 0
      %p63 = por %p61, %p62
      %p64 = scmp.ne.s32.totalorder %s52, %s53
      %p65 = scmp.eq.s32.totalorder %s22, 1
      %p66 = por %p64, %p65
      %p68 = scmp.ne.s32.totalorder %s53, %s67
      %p69 = scmp.eq.s32.totalorder %s22, 0
      %p70 = por %p68, %p69
      %s71 = ssub.s32 %s16, %s23
      %p72 = scmp.eq.s32.totalorder %s71, 0
      %s74 = sadd.s32 %s73, 1
      %s75 = scalar_select %p72, %s73, %s74
      %p78 = pneg %p72
      %p79 = scmp.eq.s32.totalorder %s16, 1
      %p80 = por %p78, %p79
      %p81 = scmp.ne.s32.totalorder %s73, %s76
      %p82 = scmp.eq.s32.totalorder %s16, 0
      %p83 = por %p81, %p82
      %p84 = scmp.ne.s32.totalorder %s73, %s76
      %p85 = scmp.eq.s32.totalorder %s21, 1
      %p86 = por %p84, %p85
      %p87 = scmp.ne.s32.totalorder %s76, %s77
      %p88 = scmp.eq.s32.totalorder %s21, 0
      %p89 = por %p87, %p88
      %p90 = scmp.ne.s32.totalorder %s76, %s77
      %p91 = scmp.eq.s32.totalorder %s22, 1
      %p92 = por %p90, %p91
      %p94 = scmp.ne.s32.totalorder %s77, %s93
      %p95 = scmp.eq.s32.totalorder %s22, 0
      %p96 = por %p94, %p95
      %s97 = ssub.s32 %s16, %s23
      %p98 = scmp.eq.s32.totalorder %s97, 0
      %s100 = sadd.s32 %s99, 1
      %s101 = scalar_select %p98, %s99, %s100
      %p104 = pneg %p98
      %p105 = scmp.eq.s32.totalorder %s16, 1
      %p106 = por %p104, %p105
      %p107 = scmp.ne.s32.totalorder %s99, %s102
      %p108 = scmp.eq.s32.totalorder %s16, 0
      %p109 = por %p107, %p108
      %p110 = scmp.ne.s32.totalorder %s99, %s102
      %p111 = scmp.eq.s32.totalorder %s21, 1
      %p112 = por %p110, %p111
      %p113 = scmp.ne.s32.totalorder %s102, %s103
      %p114 = scmp.eq.s32.totalorder %s21, 0
      %p115 = por %p113, %p114
      %p116 = scmp.ne.s32.totalorder %s102, %s103
      %p117 = scmp.eq.s32.totalorder %s22, 1
      %p118 = por %p116, %p117
      %p120 = scmp.ne.s32.totalorder %s103, %s119
      %p121 = scmp.eq.s32.totalorder %s22, 0
      %p122 = por %p120, %p121
      %p123 = scmp.le.s32.totalorder 1, %s16
      %p124 = scmp.lt.s32.totalorder %s16, 3
      %p125 = pnand %p123, %p124
      %p126 = pneg %p125
      // Predicated region
      $region9: #{tpu_custom_call.1} parent=5 // pred_check
        _
      $region10: #{tpu_custom_call.1} parent=5 // pred_check_branch
        %128 = sbr.rel (%p125) target = $region12
      $region11: #{tpu_custom_call.1} parent=5 // pred_region
        %s129 = ssub.s32 %s16, 1
        // Predicated region
        $region13: #{tpu_custom_call.1} parent=11 // pred_check
          %p130 = pneg %p63
        $region14: #{tpu_custom_call.1} parent=11 // pred_check_branch
          %132 = sbr.rel (%p130) target = $region16
        $region15: #{tpu_custom_call.1} parent=11 // pred_region
          _
        $region16: #{tpu_custom_call.1} parent=11 // pred_fallthru
          _
      $region12: #{tpu_custom_call.1} parent=5 // pred_fallthru
        _
      %p133 = scmp.lt.s32.totalorder %s16, 2
      // Predicated region
      $region17: #{tpu_custom_call.1} parent=5 // pred_check
        %p134 = pneg %p133
      $region18: #{tpu_custom_call.1} parent=5 // pred_check_branch
        %136 = sbr.rel (%p134) target = $region20
      $region19: #{tpu_custom_call.1} parent=5 // pred_region
        // Predicated region
        $region21: #{tpu_custom_call.1} parent=19 // pred_check
          %p137 = pneg %p36
        $region22: #{tpu_custom_call.1} parent=19 // pred_check_branch
          %139 = sbr.rel (%p137) target = $region24
        $region23: #{tpu_custom_call.1} parent=19 // pred_region
          %p140 = scmp.lt.s32.totalorder %s16, 1
          %s141 = scalar_select %p140, %s16, 1
          %s142 = smul.addr %s141, 20
          %s143 = smul.addr %s142, 4
          %s144 = scalar_lea.vmem %s0, %s143
        $region24: #{tpu_custom_call.1} parent=19 // pred_fallthru
          _
      $region20: #{tpu_custom_call.1} parent=5 // pred_fallthru
        _
      %p145 = scmp.le.s32.totalorder 1, %s16
      %p146 = scmp.lt.s32.totalorder %s16, 3
      %p147 = pnand %p145, %p146
      %p148 = pneg %p147
      // Predicated region
      $region25: #{tpu_custom_call.1} parent=5 // pred_check
        _
      $region26: #{tpu_custom_call.1} parent=5 // pred_check_branch
        %150 = sbr.rel (%p147) target = $region28
      $region27: #{tpu_custom_call.1} parent=5 // pred_region
        %s151 = ssub.s32 %s16, 1
        %p152 = scmp.lt.s32.totalorder %s21, 1
        %s153 = scalar_select %p152, %s21, 1
        %s154 = smul.addr %s153, 20
        %s155 = smul.addr %s154, 4
        %s156 = scalar_lea.vmem %s0, %s155
        %p157 = pneg %p42
        %p158 = pneg %p39
        %p159 = pneg %p63
        %p160 = pneg %p60
        %p161 = pneg %p89
        %p162 = pneg %p86
        %s163 = sand.u32 %s76, 1
        %s164 = scalar_lea.sflag [#allocation3], %s163
        %s165 = sand.u32 %s76, 1
        %s166 = scalar_lea.vmem [#allocation2], %s165
        %p167 = pneg %p115
        %p168 = pneg %p112
        %s169 = sand.u32 %s102, 1
        %s170 = scalar_lea.sflag [#allocation5], %s169
        %s171 = sand.u32 %s102, 1
        %s172 = scalar_lea.vmem [#allocation4], %s171
        %p173 = scmp.lt.s32.totalorder %s21, 1
        %s174 = scalar_select %p173, %s21, 1
        %s175 = smul.addr %s174, 20
        %s176 = smul.addr %s175, 4
        %s177 = scalar_lea.vmem %s0, %s176
        %v179 = vld [vmem:[%s177] sm:$0xf]
        %v180 = vld [vmem:[%s177 + $0x8] sm:$0xf]
        %v181 = vld [vmem:[%s177 + $0x10] sm:$0xf]
        %v182 = vld [vmem:[%s177 + $0x18] sm:$0xf]
        %v183 = vld [vmem:[%s177 + $0x20] sm:$0xf]
        %v184 = vld [vmem:[%s177 + $0x28] sm:$0xf]
        %v185 = vld [vmem:[%s177 + $0x30] sm:$0xf]
        %v186 = vld [vmem:[%s177 + $0x38] sm:$0xf]
        %v187 = vld [vmem:[%s177 + $0x4] sm:$0x1]
        %v188 = vld [vmem:[%s177 + $0xc] sm:$0x1]
        %v189 = vld [vmem:[%s177 + $0x14] sm:$0x1]
        %v190 = vld [vmem:[%s177 + $0x1c] sm:$0x1]
        %v191 = vld [vmem:[%s177 + $0x24] sm:$0x1]
        %v192 = vld [vmem:[%s177 + $0x2c] sm:$0x1]
        %v193 = vld [vmem:[%s177 + $0x34] sm:$0x1]
        %v194 = vld [vmem:[%s177 + $0x3c] sm:$0x1]
        %vm195 = vsmask.f32 3328
        %vm196 = vsmask.f32 7440
        %vm197 = vmor %vm195, %vm196
        %v199 = vshrl.u32 %v179, 16
        %v201 = vrot.slane %v199, 4
        %v202 = vshll.u32 %v179, 16
        %v204 = vrot.slane %v202, 5
        %v205 = vor.u32 %v201, %v204
        %v206 = vrot.slane %v205, 4
        %v208 = vshll.u32 %v187, 16
        %v210 = vrot.slane %v208, 5
        %v211 = vsel %vm197, %v206, %v210
        %v213 = vshrl.u32 %v180, 16
        %v215 = vrot.slane %v213, 4
        %v216 = vshll.u32 %v180, 16
        %v218 = vrot.slane %v216, 5
        %v219 = vor.u32 %v215, %v218
        %v220 = vrot.slane %v219, 4
        %v222 = vshll.u32 %v188, 16
        %v224 = vrot.slane %v222, 5
        %v225 = vsel %vm197, %v220, %v224
        %v227 = vshrl.u32 %v181, 16
        %v229 = vrot.slane %v227, 4
        %v230 = vshll.u32 %v181, 16
        %v232 = vrot.slane %v230, 5
        %v233 = vor.u32 %v229, %v232
        %v234 = vrot.slane %v233, 4
        %v236 = vshll.u32 %v189, 16
        %v238 = vrot.slane %v236, 5
        %v239 = vsel %vm197, %v234, %v238
        %v241 = vshrl.u32 %v182, 16
        %v243 = vrot.slane %v241, 4
        %v244 = vshll.u32 %v182, 16
        %v246 = vrot.slane %v244, 5
        %v247 = vor.u32 %v243, %v246
        %v248 = vrot.slane %v247, 4
        %v250 = vshll.u32 %v190, 16
        %v252 = vrot.slane %v250, 5
        %v253 = vsel %vm197, %v248, %v252
        %v255 = vshrl.u32 %v183, 16
        %v257 = vrot.slane %v255, 4
        %v258 = vshll.u32 %v183, 16
        %v260 = vrot.slane %v258, 5
        %v261 = vor.u32 %v257, %v260
        %v262 = vrot.slane %v261, 4
        %v264 = vshll.u32 %v191, 16
        %v266 = vrot.slane %v264, 5
        %v267 = vsel %vm197, %v262, %v266
        %v269 = vshrl.u32 %v184, 16
        %v271 = vrot.slane %v269, 4
        %v272 = vshll.u32 %v184, 16
        %v274 = vrot.slane %v272, 5
        %v275 = vor.u32 %v271, %v274
        %v276 = vrot.slane %v275, 4
        %v278 = vshll.u32 %v192, 16
        %v280 = vrot.slane %v278, 5
        %v281 = vsel %vm197, %v276, %v280
        %v283 = vshrl.u32 %v185, 16
        %v285 = vrot.slane %v283, 4
        %v286 = vshll.u32 %v185, 16
        %v288 = vrot.slane %v286, 5
        %v289 = vor.u32 %v285, %v288
        %v290 = vrot.slane %v289, 4
        %v292 = vshll.u32 %v193, 16
        %v294 = vrot.slane %v292, 5
        %v295 = vsel %vm197, %v290, %v294
        %v297 = vshrl.u32 %v186, 16
        %v299 = vrot.slane %v297, 4
        %v300 = vshll.u32 %v186, 16
        %v302 = vrot.slane %v300, 5
        %v303 = vor.u32 %v299, %v302
        %v304 = vrot.slane %v303, 4
        %v306 = vshll.u32 %v194, 16
        %v308 = vrot.slane %v306, 5
        %v309 = vsel %vm197, %v304, %v308
        %v310 = vld [vmem:[%s177] sm:$0xe]
        %v311 = vld [vmem:[%s177 + $0x8] sm:$0xe]
        %v312 = vld [vmem:[%s177 + $0x10] sm:$0xe]
        %v313 = vld [vmem:[%s177 + $0x18] sm:$0xe]
        %v314 = vld [vmem:[%s177 + $0x20] sm:$0xe]
        %v315 = vld [vmem:[%s177 + $0x28] sm:$0xe]
        %v316 = vld [vmem:[%s177 + $0x30] sm:$0xe]
        %v317 = vld [vmem:[%s177 + $0x38] sm:$0xe]
        %vm334 = vcmask 1042432
        %vm335 = vcmask 1046532
        %vm336 = vmor %vm334, %vm335
        %v337 = vrot.slane %v310, 5
        %v338 = vrot.slane %v337, 4
        %v339 = vrot.slane %v187, 5
        %v340 = vsel %vm336, %v338, %v339
        %v341 = vrot.slane %v311, 5
        %v342 = vrot.slane %v341, 4
        %v343 = vrot.slane %v188, 5
        %v344 = vsel %vm336, %v342, %v343
        %v345 = vrot.slane %v312, 5
        %v346 = vrot.slane %v345, 4
        %v347 = vrot.slane %v189, 5
        %v348 = vsel %vm336, %v346, %v347
        %v349 = vrot.slane %v313, 5
        %v350 = vrot.slane %v349, 4
        %v351 = vrot.slane %v190, 5
        %v352 = vsel %vm336, %v350, %v351
        %v353 = vrot.slane %v314, 5
        %v354 = vrot.slane %v353, 4
        %v355 = vrot.slane %v191, 5
        %v356 = vsel %vm336, %v354, %v355
        %v357 = vrot.slane %v315, 5
        %v358 = vrot.slane %v357, 4
        %v359 = vrot.slane %v192, 5
        %v360 = vsel %vm336, %v358, %v359
        %v361 = vrot.slane %v316, 5
        %v362 = vrot.slane %v361, 4
        %v363 = vrot.slane %v193, 5
        %v364 = vsel %vm336, %v362, %v363
        %v365 = vrot.slane %v317, 5
        %v366 = vrot.slane %v365, 4
        %v367 = vrot.slane %v194, 5
        %v368 = vsel %vm336, %v366, %v367
        %s369 = scalar_lea.vmem %s177, 8
        %v370 = vld [vmem:[%s369] sm:$0xf]
        %v371 = vld [vmem:[%s369 + $0x8] sm:$0xf]
        %v372 = vld [vmem:[%s369 + $0x10] sm:$0xf]
        %v373 = vld [vmem:[%s369 + $0x18] sm:$0xf]
        %v374 = vld [vmem:[%s369 + $0x20] sm:$0xf]
        %v375 = vld [vmem:[%s369 + $0x28] sm:$0xf]
        %v376 = vld [vmem:[%s369 + $0x30] sm:$0xf]
        %v377 = vld [vmem:[%s369 + $0x38] sm:$0xf]
        %v378 = vld [vmem:[%s369 + $0x4] sm:$0x1]
        %v379 = vld [vmem:[%s369 + $0xc] sm:$0x1]
        %v380 = vld [vmem:[%s369 + $0x14] sm:$0x1]
        %v381 = vld [vmem:[%s369 + $0x1c] sm:$0x1]
        %v382 = vld [vmem:[%s369 + $0x24] sm:$0x1]
        %v383 = vld [vmem:[%s369 + $0x2c] sm:$0x1]
        %v384 = vld [vmem:[%s369 + $0x34] sm:$0x1]
        %v385 = vld [vmem:[%s369 + $0x3c] sm:$0x1]
        %v387 = vshrl.u32 %v370, 16
        %v389 = vrot.slane %v387, 4
        %v390 = vshll.u32 %v370, 16
        %v392 = vrot.slane %v390, 5
        %v393 = vor.u32 %v389, %v392
        %v394 = vrot.slane %v393, 4
        %v396 = vshll.u32 %v378, 16
        %v398 = vrot.slane %v396, 5
        %v399 = vsel %vm197, %v394, %v398
        %v401 = vshrl.u32 %v371, 16
        %v403 = vrot.slane %v401, 4
        %v404 = vshll.u32 %v371, 16
        %v406 = vrot.slane %v404, 5
        %v407 = vor.u32 %v403, %v406
        %v408 = vrot.slane %v407, 4
        %v410 = vshll.u32 %v379, 16
        %v412 = vrot.slane %v410, 5
        %v413 = vsel %vm197, %v408, %v412
        %v415 = vshrl.u32 %v372, 16
        %v417 = vrot.slane %v415, 4
        %v418 = vshll.u32 %v372, 16
        %v420 = vrot.slane %v418, 5
        %v421 = vor.u32 %v417, %v420
        %v422 = vrot.slane %v421, 4
        %v424 = vshll.u32 %v380, 16
        %v426 = vrot.slane %v424, 5
        %v427 = vsel %vm197, %v422, %v426
        %v429 = vshrl.u32 %v373, 16
        %v431 = vrot.slane %v429, 4
        %v432 = vshll.u32 %v373, 16
        %v434 = vrot.slane %v432, 5
        %v435 = vor.u32 %v431, %v434
        %v436 = vrot.slane %v435, 4
        %v438 = vshll.u32 %v381, 16
        %v440 = vrot.slane %v438, 5
        %v441 = vsel %vm197, %v436, %v440
        %v443 = vshrl.u32 %v374, 16
        %v445 = vrot.slane %v443, 4
        %v446 = vshll.u32 %v374, 16
        %v448 = vrot.slane %v446, 5
        %v449 = vor.u32 %v445, %v448
        %v450 = vrot.slane %v449, 4
        %v452 = vshll.u32 %v382, 16
        %v454 = vrot.slane %v452, 5
        %v455 = vsel %vm197, %v450, %v454
        %v457 = vshrl.u32 %v375, 16
        %v459 = vrot.slane %v457, 4
        %v460 = vshll.u32 %v375, 16
        %v462 = vrot.slane %v460, 5
        %v463 = vor.u32 %v459, %v462
        %v464 = vrot.slane %v463, 4
        %v466 = vshll.u32 %v383, 16
        %v468 = vrot.slane %v466, 5
        %v469 = vsel %vm197, %v464, %v468
        %v471 = vshrl.u32 %v376, 16
        %v473 = vrot.slane %v471, 4
        %v474 = vshll.u32 %v376, 16
        %v476 = vrot.slane %v474, 5
        %v477 = vor.u32 %v473, %v476
        %v478 = vrot.slane %v477, 4
        %v480 = vshll.u32 %v384, 16
        %v482 = vrot.slane %v480, 5
        %v483 = vsel %vm197, %v478, %v482
        %v485 = vshrl.u32 %v377, 16
        %v487 = vrot.slane %v485, 4
        %v488 = vshll.u32 %v377, 16
        %v490 = vrot.slane %v488, 5
        %v491 = vor.u32 %v487, %v490
        %v492 = vrot.slane %v491, 4
        %v494 = vshll.u32 %v385, 16
        %v496 = vrot.slane %v494, 5
        %v497 = vsel %vm197, %v492, %v496
        %v498 = vld [vmem:[%s369] sm:$0xe]
        %v499 = vld [vmem:[%s369 + $0x8] sm:$0xe]
        %v500 = vld [vmem:[%s369 + $0x10] sm:$0xe]
        %v501 = vld [vmem:[%s369 + $0x18] sm:$0xe]
        %v502 = vld [vmem:[%s369 + $0x20] sm:$0xe]
        %v503 = vld [vmem:[%s369 + $0x28] sm:$0xe]
        %v504 = vld [vmem:[%s369 + $0x30] sm:$0xe]
        %v505 = vld [vmem:[%s369 + $0x38] sm:$0xe]
        %v522 = vrot.slane %v498, 5
        %v523 = vrot.slane %v522, 4
        %v524 = vrot.slane %v378, 5
        %v525 = vsel %vm336, %v523, %v524
        %v526 = vrot.slane %v499, 5
        %v527 = vrot.slane %v526, 4
        %v528 = vrot.slane %v379, 5
        %v529 = vsel %vm336, %v527, %v528
        %v530 = vrot.slane %v500, 5
        %v531 = vrot.slane %v530, 4
        %v532 = vrot.slane %v380, 5
        %v533 = vsel %vm336, %v531, %v532
        %v534 = vrot.slane %v501, 5
        %v535 = vrot.slane %v534, 4
        %v536 = vrot.slane %v381, 5
        %v537 = vsel %vm336, %v535, %v536
        %v538 = vrot.slane %v502, 5
        %v539 = vrot.slane %v538, 4
        %v540 = vrot.slane %v382, 5
        %v541 = vsel %vm336, %v539, %v540
        %v542 = vrot.slane %v503, 5
        %v543 = vrot.slane %v542, 4
        %v544 = vrot.slane %v383, 5
        %v545 = vsel %vm336, %v543, %v544
        %v546 = vrot.slane %v504, 5
        %v547 = vrot.slane %v546, 4
        %v548 = vrot.slane %v384, 5
        %v549 = vsel %vm336, %v547, %v548
        %v550 = vrot.slane %v505, 5
        %v551 = vrot.slane %v550, 4
        %v552 = vrot.slane %v385, 5
        %v553 = vsel %vm336, %v551, %v552
        %s554 = scalar_lea.vmem %s177, 16
        %v555 = vld [vmem:[%s554] sm:$0xf]
        %v556 = vld [vmem:[%s554 + $0x8] sm:$0xf]
        %v557 = vld [vmem:[%s554 + $0x10] sm:$0xf]
        %v558 = vld [vmem:[%s554 + $0x18] sm:$0xf]
        %v559 = vld [vmem:[%s554 + $0x20] sm:$0xf]
        %v560 = vld [vmem:[%s554 + $0x28] sm:$0xf]
        %v561 = vld [vmem:[%s554 + $0x30] sm:$0xf]
        %v562 = vld [vmem:[%s554 + $0x38] sm:$0xf]
        %v563 = vld [vmem:[%s554 + $0x4] sm:$0x1]
        %v564 = vld [vmem:[%s554 + $0xc] sm:$0x1]
        %v565 = vld [vmem:[%s554 + $0x14] sm:$0x1]
        %v566 = vld [vmem:[%s554 + $0x1c] sm:$0x1]
        %v567 = vld [vmem:[%s554 + $0x24] sm:$0x1]
        %v568 = vld [vmem:[%s554 + $0x2c] sm:$0x1]
        %v569 = vld [vmem:[%s554 + $0x34] sm:$0x1]
        %v570 = vld [vmem:[%s554 + $0x3c] sm:$0x1]
        %v572 = vshrl.u32 %v555, 16
        %v574 = vrot.slane %v572, 4
        %v575 = vshll.u32 %v555, 16
        %v577 = vrot.slane %v575, 5
        %v578 = vor.u32 %v574, %v577
        %v579 = vrot.slane %v578, 4
        %v581 = vshll.u32 %v563, 16
        %v583 = vrot.slane %v581, 5
        %v584 = vsel %vm197, %v579, %v583
        %v586 = vshrl.u32 %v556, 16
        %v588 = vrot.slane %v586, 4
        %v589 = vshll.u32 %v556, 16
        %v591 = vrot.slane %v589, 5
        %v592 = vor.u32 %v588, %v591
        %v593 = vrot.slane %v592, 4
        %v595 = vshll.u32 %v564, 16
        %v597 = vrot.slane %v595, 5
        %v598 = vsel %vm197, %v593, %v597
        %v600 = vshrl.u32 %v557, 16
        %v602 = vrot.slane %v600, 4
        %v603 = vshll.u32 %v557, 16
        %v605 = vrot.slane %v603, 5
        %v606 = vor.u32 %v602, %v605
        %v607 = vrot.slane %v606, 4
        %v609 = vshll.u32 %v565, 16
        %v611 = vrot.slane %v609, 5
        %v612 = vsel %vm197, %v607, %v611
        %v614 = vshrl.u32 %v558, 16
        %v616 = vrot.slane %v614, 4
        %v617 = vshll.u32 %v558, 16
        %v619 = vrot.slane %v617, 5
        %v620 = vor.u32 %v616, %v619
        %v621 = vrot.slane %v620, 4
        %v623 = vshll.u32 %v566, 16
        %v625 = vrot.slane %v623, 5
        %v626 = vsel %vm197, %v621, %v625
        %v628 = vshrl.u32 %v559, 16
        %v630 = vrot.slane %v628, 4
        %v631 = vshll.u32 %v559, 16
        %v633 = vrot.slane %v631, 5
        %v634 = vor.u32 %v630, %v633
        %v635 = vrot.slane %v634, 4
        %v637 = vshll.u32 %v567, 16
        %v639 = vrot.slane %v637, 5
        %v640 = vsel %vm197, %v635, %v639
        %v642 = vshrl.u32 %v560, 16
        %v644 = vrot.slane %v642, 4
        %v645 = vshll.u32 %v560, 16
        %v647 = vrot.slane %v645, 5
        %v648 = vor.u32 %v644, %v647
        %v649 = vrot.slane %v648, 4
        %v651 = vshll.u32 %v568, 16
        %v653 = vrot.slane %v651, 5
        %v654 = vsel %vm197, %v649, %v653
        %v656 = vshrl.u32 %v561, 16
        %v658 = vrot.slane %v656, 4
        %v659 = vshll.u32 %v561, 16
        %v661 = vrot.slane %v659, 5
        %v662 = vor.u32 %v658, %v661
        %v663 = vrot.slane %v662, 4
        %v665 = vshll.u32 %v569, 16
        %v667 = vrot.slane %v665, 5
        %v668 = vsel %vm197, %v663, %v667
        %v670 = vshrl.u32 %v562, 16
        %v672 = vrot.slane %v670, 4
        %v673 = vshll.u32 %v562, 16
        %v675 = vrot.slane %v673, 5
        %v676 = vor.u32 %v672, %v675
        %v677 = vrot.slane %v676, 4
        %v679 = vshll.u32 %v570, 16
        %v681 = vrot.slane %v679, 5
        %v682 = vsel %vm197, %v677, %v681
        %v683 = vld [vmem:[%s554] sm:$0xe]
        %v684 = vld [vmem:[%s554 + $0x8] sm:$0xe]
        %v685 = vld [vmem:[%s554 + $0x10] sm:$0xe]
        %v686 = vld [vmem:[%s554 + $0x18] sm:$0xe]
        %v687 = vld [vmem:[%s554 + $0x20] sm:$0xe]
        %v688 = vld [vmem:[%s554 + $0x28] sm:$0xe]
        %v689 = vld [vmem:[%s554 + $0x30] sm:$0xe]
        %v690 = vld [vmem:[%s554 + $0x38] sm:$0xe]
        %v707 = vrot.slane %v683, 5
        %v708 = vrot.slane %v707, 4
        %v709 = vrot.slane %v563, 5
        %v710 = vsel %vm336, %v708, %v709
        %v711 = vrot.slane %v684, 5
        %v712 = vrot.slane %v711, 4
        %v713 = vrot.slane %v564, 5
        %v714 = vsel %vm336, %v712, %v713
        %v715 = vrot.slane %v685, 5
        %v716 = vrot.slane %v715, 4
        %v717 = vrot.slane %v565, 5
        %v718 = vsel %vm336, %v716, %v717
        %v719 = vrot.slane %v686, 5
        %v720 = vrot.slane %v719, 4
        %v721 = vrot.slane %v566, 5
        %v722 = vsel %vm336, %v720, %v721
        %v723 = vrot.slane %v687, 5
        %v724 = vrot.slane %v723, 4
        %v725 = vrot.slane %v567, 5
        %v726 = vsel %vm336, %v724, %v725
        %v727 = vrot.slane %v688, 5
        %v728 = vrot.slane %v727, 4
        %v729 = vrot.slane %v568, 5
        %v730 = vsel %vm336, %v728, %v729
        %v731 = vrot.slane %v689, 5
        %v732 = vrot.slane %v731, 4
        %v733 = vrot.slane %v569, 5
        %v734 = vsel %vm336, %v732, %v733
        %v735 = vrot.slane %v690, 5
        %v736 = vrot.slane %v735, 4
        %v737 = vrot.slane %v570, 5
        %v738 = vsel %vm336, %v736, %v737
        %s739 = scalar_lea.vmem %s1, 60
        %v740 = vld [vmem:[%s739] sm:$0xf]
        %s741 = scalar_lea.vmem %s1, 52
        %v742 = vld [vmem:[%s741] sm:$0xf]
        %v743 = vunpack.c.l.b16 %v211
        %v744 = vunpack.c.l.b16 %v225
        %v745 = vunpack.c.l.b16 %v239
        %v746 = vunpack.c.l.b16 %v253
        %v747 = vunpack.c.l.b16 %v267
        %v748 = vunpack.c.l.b16 %v281
        %v749 = vunpack.c.l.b16 %v295
        %v750 = vunpack.c.l.b16 %v309
        %v751 = vpack.c.b16 %v744, %v743
        %v752 = vpack.c.b16 %v746, %v745
        %v753 = vpack.c.b16 %v748, %v747
        %v754 = vpack.c.b16 %v750, %v749
        %vm755 = vcmask 64512
        %v757 = vsel %vm755, %v751, 0
        %v760 = vsel %vm755, %v752, 0
        %v763 = vsel %vm755, %v753, 0
        %v766 = vsel %vm755, %v754, 0
        %vm768 = vcmask 1043456
        %v770 = vsel %vm768, %v742, 0
        %772 = vmatprep.subr.bf16.mxu0 0
        %773 = vmatpush1.bf16.msra.mxu0 %v770
        %774 = vmatprep.subr.bf16.mxu0 0
        %775 = vmatpush1.bf16.msra.mxu0 0
        %776 = vmatprep.subr.bf16.mxu0 0
        %777 = vmatpush1.bf16.msra.mxu0 0
        %778 = vmatprep.subr.bf16.mxu0 0
        %779 = vmatpush1.bf16.msra.mxu0 0
        %780 = vmatprep.subr.bf16.mxu0 0
        %781 = vmatpush1.bf16.msra.mxu0 0
        %782 = vmatprep.subr.bf16.mxu0 0
        %783 = vmatpush1.bf16.msra.mxu0 0
        %784 = vmatprep.subr.bf16.mxu0 0
        %785 = vmatpush1.bf16.msra.mxu0 0
        %786 = vmatprep.subr.bf16.mxu0 0
        %787 = vmatpush1.bf16.msra.mxu0 0
        %788 = vmatprep.subr.bf16.mxu0 0
        %789 = vmatpush1.bf16.msra.mxu0 0
        %790 = vmatprep.subr.bf16.mxu0 0
        %791 = vmatpush1.bf16.msra.mxu0 0
        %792 = vmatprep.subr.bf16.mxu0 0
        %793 = vmatpush1.bf16.msra.mxu0 0
        %794 = vmatprep.subr.bf16.mxu0 0
        %795 = vmatpush1.bf16.msra.mxu0 0
        %796 = vmatprep.subr.bf16.mxu0 0
        %797 = vmatpush1.bf16.msra.mxu0 0
        %798 = vmatprep.subr.bf16.mxu0 0
        %799 = vmatpush1.bf16.msra.mxu0 0
        %800 = vmatprep.subr.bf16.mxu0 0
        %801 = vmatpush1.bf16.msra.mxu0 0
        %802 = vmatprep.subr.bf16.mxu0 0
        %803 = vmatpush1.bf16.msra.mxu0 0
        %804 = vmatprep.mubr.bf16.mxu0 0
        %805 = vmatmul.mubr.bf16.gmra.mrb[0].mxu0 %v757
        %v806 = vpop.f32.mrb[0].mxu0
        %v807 = vadd.f32 0.0, %v806
        %v808 = vpop.f32.mrb[0].mxu0
        %v809 = vpop.f32.mrb[0].mxu0
        %v810 = vadd.f32 0.0, %v809
        %v811 = vpop.f32.mrb[0].mxu0
        %812 = vmatprep.mubr.bf16.mxu0 0
        %813 = vmatmul.mubr.bf16.gmra.mrb[0].mxu0 %v760
        %v814 = vpop.f32.mrb[0].mxu0
        %v815 = vadd.f32 0.0, %v814
        %v816 = vpop.f32.mrb[0].mxu0
        %v817 = vpop.f32.mrb[0].mxu0
        %v818 = vadd.f32 0.0, %v817
        %v819 = vpop.f32.mrb[0].mxu0
        %820 = vmatprep.mubr.bf16.mxu0 0
        %821 = vmatmul.mubr.bf16.gmra.mrb[0].mxu0 %v763
        %v822 = vpop.f32.mrb[0].mxu0
        %v823 = vadd.f32 0.0, %v822
        %v824 = vpop.f32.mrb[0].mxu0
        %v825 = vpop.f32.mrb[0].mxu0
        %v826 = vadd.f32 0.0, %v825
        %v827 = vpop.f32.mrb[0].mxu0
        %828 = vmatprep.mubr.bf16.mxu0 0
        %829 = vmatmul.mubr.bf16.gmra.mrb[0].mxu0 %v766
        %v830 = vpop.f32.mrb[0].mxu0
        %v831 = vadd.f32 0.0, %v830
        %v832 = vpop.f32.mrb[0].mxu0
        %v833 = vpop.f32.mrb[0].mxu0
        %v834 = vadd.f32 0.0, %v833
        %v835 = vpop.f32.mrb[0].mxu0
        %836 = vdwg.mxu0
        %v845 = vunpack.c.l.b16 %v179
        %v846 = vunpack.c.l.b16 %v180
        %v847 = vunpack.c.l.b16 %v181
        %v848 = vunpack.c.l.b16 %v182
        %v849 = vunpack.c.l.b16 %v183
        %v850 = vunpack.c.l.b16 %v184
        %v851 = vunpack.c.l.b16 %v185
        %v852 = vunpack.c.l.b16 %v186
        %v853 = vpack.c.b16 %v846, %v845
        %v854 = vpack.c.b16 %v848, %v847
        %v855 = vpack.c.b16 %v850, %v849
        %v856 = vpack.c.b16 %v852, %v851
        %v858 = vsel %vm755, %v853, 0
        %v861 = vsel %vm755, %v854, 0
        %v864 = vsel %vm755, %v855, 0
        %v867 = vsel %vm755, %v856, 0
        %v870 = vsel %vm768, %v740, 0
        %872 = vmatprep.subr.bf16.mxu0 0
        %873 = vmatpush1.bf16.msra.mxu0 %v870
        %874 = vmatprep.subr.bf16.mxu0 0
        %875 = vmatpush1.bf16.msra.mxu0 0
        %876 = vmatprep.subr.bf16.mxu0 0
        %877 = vmatpush1.bf16.msra.mxu0 0
        %878 = vmatprep.subr.bf16.mxu0 0
        %879 = vmatpush1.bf16.msra.mxu0 0
        %880 = vmatprep.subr.bf16.mxu0 0
        %881 = vmatpush1.bf16.msra.mxu0 0
        %882 = vmatprep.subr.bf16.mxu0 0
        %883 = vmatpush1.bf16.msra.mxu0 0
        %884 = vmatprep.subr.bf16.mxu0 0
        %885 = vmatpush1.bf16.msra.mxu0 0
        %886 = vmatprep.subr.bf16.mxu0 0
        %887 = vmatpush1.bf16.msra.mxu0 0
        %888 = vmatprep.subr.bf16.mxu0 0
        %889 = vmatpush1.bf16.msra.mxu0 0
        %890 = vmatprep.subr.bf16.mxu0 0
        %891 = vmatpush1.bf16.msra.mxu0 0
        %892 = vmatprep.subr.bf16.mxu0 0
        %893 = vmatpush1.bf16.msra.mxu0 0
        %894 = vmatprep.subr.bf16.mxu0 0
        %895 = vmatpush1.bf16.msra.mxu0 0
        %896 = vmatprep.subr.bf16.mxu0 0
        %897 = vmatpush1.bf16.msra.mxu0 0
        %898 = vmatprep.subr.bf16.mxu0 0
        %899 = vmatpush1.bf16.msra.mxu0 0
        %900 = vmatprep.subr.bf16.mxu0 0
        %901 = vmatpush1.bf16.msra.mxu0 0
        %902 = vmatprep.subr.bf16.mxu0 0
        %903 = vmatpush1.bf16.msra.mxu0 0
        %904 = vmatprep.mubr.bf16.mxu0 0
        %905 = vmatmul.mubr.bf16.gmra.mrb[0].mxu0 %v858
        %v906 = vpop.f32.mrb[0].mxu0
        %v907 = vadd.f32 %v807, %v906
        %v908 = vpop.f32.mrb[0].mxu0
        %v909 = vpop.f32.mrb[0].mxu0
        %v910 = vadd.f32 %v810, %v909
        %v911 = vpop.f32.mrb[0].mxu0
        %912 = vmatprep.mubr.bf16.mxu0 0
        %913 = vmatmul.mubr.bf16.gmra.mrb[0].mxu0 %v861
        %v914 = vpop.f32.mrb[0].mxu0
        %v915 = vadd.f32 %v815, %v914
        %v916 = vpop.f32.mrb[0].mxu0
        %v917 = vpop.f32.mrb[0].mxu0
        %v918 = vadd.f32 %v818, %v917
        %v919 = vpop.f32.mrb[0].mxu0
        %920 = vmatprep.mubr.bf16.mxu0 0
        %921 = vmatmul.mubr.bf16.gmra.mrb[0].mxu0 %v864
        %v922 = vpop.f32.mrb[0].mxu0
        %v923 = vadd.f32 %v823, %v922
        %v924 = vpop.f32.mrb[0].mxu0
        %v925 = vpop.f32.mrb[0].mxu0
        %v926 = vadd.f32 %v826, %v925
        %v927 = vpop.f32.mrb[0].mxu0
        %928 = vmatprep.mubr.bf16.mxu0 0
        %929 = vmatmul.mubr.bf16.gmra.mrb[0].mxu0 %v867
        %v930 = vpop.f32.mrb[0].mxu0
        %v931 = vadd.f32 %v831, %v930
        %v932 = vpop.f32.mrb[0].mxu0
        %v933 = vpop.f32.mrb[0].mxu0
        %v934 = vadd.f32 %v834, %v933
        %v935 = vpop.f32.mrb[0].mxu0
        %936 = vdwg.mxu0
        %s937 = scalar_lea.vmem %s1, 28
        %v938 = vld [vmem:[%s937] sm:$0xf]
        %v947 = vunpack.c.l.b16 %v370
        %v948 = vunpack.c.l.b16 %v371
        %v949 = vunpack.c.l.b16 %v372
        %v950 = vunpack.c.l.b16 %v373
        %v951 = vunpack.c.l.b16 %v374
        %v952 = vunpack.c.l.b16 %v375
        %v953 = vunpack.c.l.b16 %v376
        %v954 = vunpack.c.l.b16 %v377
        %v955 = vpack.c.b16 %v948, %v947
        %v956 = vpack.c.b16 %v950, %v949
        %v957 = vpack.c.b16 %v952, %v951
        %v958 = vpack.c.b16 %v954, %v953
        %v960 = vsel %vm755, %v955, 0
        %v963 = vsel %vm755, %v956, 0
        %v966 = vsel %vm755, %v957, 0
        %v969 = vsel %vm755, %v958, 0
        %v972 = vsel %vm768, %v938, 0
        %974 = vmatprep.subr.bf16.mxu0 0
        %975 = vmatpush1.bf16.msra.mxu0 %v972
        %976 = vmatprep.subr.bf16.mxu0 0
        %977 = vmatpush1.bf16.msra.mxu0 0
        %978 = vmatprep.subr.bf16.mxu0 0
        %979 = vmatpush1.bf16.msra.mxu0 0
        %980 = vmatprep.subr.bf16.mxu0 0
        %981 = vmatpush1.bf16.msra.mxu0 0
        %982 = vmatprep.subr.bf16.mxu0 0
        %983 = vmatpush1.bf16.msra.mxu0 0
        %984 = vmatprep.subr.bf16.mxu0 0
        %985 = vmatpush1.bf16.msra.mxu0 0
        %986 = vmatprep.subr.bf16.mxu0 0
        %987 = vmatpush1.bf16.msra.mxu0 0
        %988 = vmatprep.subr.bf16.mxu0 0
        %989 = vmatpush1.bf16.msra.mxu0 0
        %990 = vmatprep.subr.bf16.mxu0 0
        %991 = vmatpush1.bf16.msra.mxu0 0
        %992 = vmatprep.subr.bf16.mxu0 0
        %993 = vmatpush1.bf16.msra.mxu0 0
        %994 = vmatprep.subr.bf16.mxu0 0
        %995 = vmatpush1.bf16.msra.mxu0 0
        %996 = vmatprep.subr.bf16.mxu0 0
        %997 = vmatpush1.bf16.msra.mxu0 0
        %998 = vmatprep.subr.bf16.mxu0 0
        %999 = vmatpush1.bf16.msra.mxu0 0
        %1000 = vmatprep.subr.bf16.mxu0 0
        %1001 = vmatpush1.bf16.msra.mxu0 0
        %1002 = vmatprep.subr.bf16.mxu0 0
        %1003 = vmatpush1.bf16.msra.mxu0 0
        %1004 = vmatprep.subr.bf16.mxu0 0
        %1005 = vmatpush1.bf16.msra.mxu0 0
        %1006 = vmatprep.mubr.bf16.mxu0 0
        %1007 = vmatmul.mubr.bf16.gmra.mrb[0].mxu0 %v960
        %v1008 = vpop.f32.mrb[0].mxu0
        %v1009 = vadd.f32 0.0, %v1008
        %v1010 = vpop.f32.mrb[0].mxu0
        %v1011 = vpop.f32.mrb[0].mxu0
        %v1012 = vadd.f32 0.0, %v1011
        %v1013 = vpop.f32.mrb[0].mxu0
        %1014 = vmatprep.mubr.bf16.mxu0 0
        %1015 = vmatmul.mubr.bf16.gmra.mrb[0].mxu0 %v963
        %v1016 = vpop.f32.mrb[0].mxu0
        %v1017 = vadd.f32 0.0, %v1016
        %v1018 = vpop.f32.mrb[0].mxu0
        %v1019 = vpop.f32.mrb[0].mxu0
        %v1020 = vadd.f32 0.0, %v1019
        %v1021 = vpop.f32.mrb[0].mxu0
        %1022 = vmatprep.mubr.bf16.mxu0 0
        %1023 = vmatmul.mubr.bf16.gmra.mrb[0].mxu0 %v966
        %v1024 = vpop.f32.mrb[0].mxu0
        %v1025 = vadd.f32 0.0, %v1024
        %v1026 = vpop.f32.mrb[0].mxu0
        %v1027 = vpop.f32.mrb[0].mxu0
        %v1028 = vadd.f32 0.0, %v1027
        %v1029 = vpop.f32.mrb[0].mxu0
        %1030 = vmatprep.mubr.bf16.mxu0 0
        %1031 = vmatmul.mubr.bf16.gmra.mrb[0].mxu0 %v969
        %v1032 = vpop.f32.mrb[0].mxu0
        %v1033 = vadd.f32 0.0, %v1032
        %v1034 = vpop.f32.mrb[0].mxu0
        %v1035 = vpop.f32.mrb[0].mxu0
        %v1036 = vadd.f32 0.0, %v1035
        %v1037 = vpop.f32.mrb[0].mxu0
        %1038 = vdwg.mxu0
        %v1039 = vadd.f32 %v907, %v1009
        %v1040 = vadd.f32 %v910, %v1012
        %v1041 = vadd.f32 %v915, %v1017
        %v1042 = vadd.f32 %v918, %v1020
        %v1043 = vadd.f32 %v923, %v1025
        %v1044 = vadd.f32 %v926, %v1028
        %v1045 = vadd.f32 %v931, %v1033
        %v1046 = vadd.f32 %v934, %v1036
        %s1047 = scalar_lea.vmem %s1, 20
        %v1048 = vld [vmem:[%s1047] sm:$0xf]
        %v1049 = vunpack.c.l.b16 %v399
        %v1050 = vunpack.c.l.b16 %v413
        %v1051 = vunpack.c.l.b16 %v427
        %v1052 = vunpack.c.l.b16 %v441
        %v1053 = vunpack.c.l.b16 %v455
        %v1054 = vunpack.c.l.b16 %v469
        %v1055 = vunpack.c.l.b16 %v483
        %v1056 = vunpack.c.l.b16 %v497
        %v1057 = vpack.c.b16 %v1050, %v1049
        %v1058 = vpack.c.b16 %v1052, %v1051
        %v1059 = vpack.c.b16 %v1054, %v1053
        %v1060 = vpack.c.b16 %v1056, %v1055
        %v1062 = vsel %vm755, %v1057, 0
        %v1065 = vsel %vm755, %v1058, 0
        %v1068 = vsel %vm755, %v1059, 0
        %v1071 = vsel %vm755, %v1060, 0
        %v1074 = vsel %vm768, %v1048, 0
        %1076 = vmatprep.subr.bf16.mxu0 0
        %1077 = vmatpush1.bf16.msra.mxu0 %v1074
        %1078 = vmatprep.subr.bf16.mxu0 0
        %1079 = vmatpush1.bf16.msra.mxu0 0
        %1080 = vmatprep.subr.bf16.mxu0 0
        %1081 = vmatpush1.bf16.msra.mxu0 0
        %1082 = vmatprep.subr.bf16.mxu0 0
        %1083 = vmatpush1.bf16.msra.mxu0 0
        %1084 = vmatprep.subr.bf16.mxu0 0
        %1085 = vmatpush1.bf16.msra.mxu0 0
        %1086 = vmatprep.subr.bf16.mxu0 0
        %1087 = vmatpush1.bf16.msra.mxu0 0
        %1088 = vmatprep.subr.bf16.mxu0 0
        %1089 = vmatpush1.bf16.msra.mxu0 0
        %1090 = vmatprep.subr.bf16.mxu0 0
        %1091 = vmatpush1.bf16.msra.mxu0 0
        %1092 = vmatprep.subr.bf16.mxu0 0
        %1093 = vmatpush1.bf16.msra.mxu0 0
        %1094 = vmatprep.subr.bf16.mxu0 0
        %1095 = vmatpush1.bf16.msra.mxu0 0
        %1096 = vmatprep.subr.bf16.mxu0 0
        %1097 = vmatpush1.bf16.msra.mxu0 0
        %1098 = vmatprep.subr.bf16.mxu0 0
        %1099 = vmatpush1.bf16.msra.mxu0 0
        %1100 = vmatprep.subr.bf16.mxu0 0
        %1101 = vmatpush1.bf16.msra.mxu0 0
        %1102 = vmatprep.subr.bf16.mxu0 0
        %1103 = vmatpush1.bf16.msra.mxu0 0
        %1104 = vmatprep.subr.bf16.mxu0 0
        %1105 = vmatpush1.bf16.msra.mxu0 0
        %1106 = vmatprep.subr.bf16.mxu0 0
        %1107 = vmatpush1.bf16.msra.mxu0 0
        %1108 = vmatprep.mubr.bf16.mxu0 0
        %1109 = vmatmul.mubr.bf16.gmra.mrb[0].mxu0 %v1062
        %v1110 = vpop.f32.mrb[0].mxu0
        %v1111 = vadd.f32 0.0, %v1110
        %v1112 = vpop.f32.mrb[0].mxu0
        %v1113 = vpop.f32.mrb[0].mxu0
        %v1114 = vadd.f32 0.0, %v1113
        %v1115 = vpop.f32.mrb[0].mxu0
        %1116 = vmatprep.mubr.bf16.mxu0 0
        %1117 = vmatmul.mubr.bf16.gmra.mrb[0].mxu0 %v1065
        %v1118 = vpop.f32.mrb[0].mxu0
        %v1119 = vadd.f32 0.0, %v1118
        %v1120 = vpop.f32.mrb[0].mxu0
        %v1121 = vpop.f32.mrb[0].mxu0
        %v1122 = vadd.f32 0.0, %v1121
        %v1123 = vpop.f32.mrb[0].mxu0
        %1124 = vmatprep.mubr.bf16.mxu0 0
        %1125 = vmatmul.mubr.bf16.gmra.mrb[0].mxu0 %v1068
        %v1126 = vpop.f32.mrb[0].mxu0
        %v1127 = vadd.f32 0.0, %v1126
        %v1128 = vpop.f32.mrb[0].mxu0
        %v1129 = vpop.f32.mrb[0].mxu0
        %v1130 = vadd.f32 0.0, %v1129
        %v1131 = vpop.f32.mrb[0].mxu0
        %1132 = vmatprep.mubr.bf16.mxu0 0
        %1133 = vmatmul.mubr.bf16.gmra.mrb[0].mxu0 %v1071
        %v1134 = vpop.f32.mrb[0].mxu0
        %v1135 = vadd.f32 0.0, %v1134
        %v1136 = vpop.f32.mrb[0].mxu0
        %v1137 = vpop.f32.mrb[0].mxu0
        %v1138 = vadd.f32 0.0, %v1137
        %v1139 = vpop.f32.mrb[0].mxu0
        %1140 = vdwg.mxu0
        %v1141 = vadd.f32 %v1039, %v1111
        %v1142 = vadd.f32 %v1040, %v1114
        %v1143 = vadd.f32 %v1041, %v1119
        %v1144 = vadd.f32 %v1042, %v1122
        %v1145 = vadd.f32 %v1043, %v1127
        %v1146 = vadd.f32 %v1044, %v1130
        %v1147 = vadd.f32 %v1045, %v1135
        %v1148 = vadd.f32 %v1046, %v1138
        %s1149 = scalar_lea.vmem %s1, 56
        %v1150 = vld [vmem:[%s1149] sm:$0xf]
        %s1151 = scalar_lea.vmem %s1, 48
        %v1152 = vld [vmem:[%s1151] sm:$0xf]
        %v1153 = vunpack.c.l.b16 %v340
        %v1154 = vunpack.c.l.b16 %v344
        %v1155 = vunpack.c.l.b16 %v348
        %v1156 = vunpack.c.l.b16 %v352
        %v1157 = vunpack.c.l.b16 %v356
        %v1158 = vunpack.c.l.b16 %v360
        %v1159 = vunpack.c.l.b16 %v364
        %v1160 = vunpack.c.l.b16 %v368
        %v1161 = vpack.c.b16 %v1154, %v1153
        %v1162 = vpack.c.b16 %v1156, %v1155
        %v1163 = vpack.c.b16 %v1158, %v1157
        %v1164 = vpack.c.b16 %v1160, %v1159
        %v1166 = vsel %vm755, %v1161, 0
        %v1169 = vsel %vm755, %v1162, 0
        %v1172 = vsel %vm755, %v1163, 0
        %v1175 = vsel %vm755, %v1164, 0
        %v1178 = vsel %vm768, %v1152, 0
        %1180 = vmatprep.subr.bf16.mxu0 0
        %1181 = vmatpush1.bf16.msra.mxu0 %v1178
        %1182 = vmatprep.subr.bf16.mxu0 0
        %1183 = vmatpush1.bf16.msra.mxu0 0
        %1184 = vmatprep.subr.bf16.mxu0 0
        %1185 = vmatpush1.bf16.msra.mxu0 0
        %1186 = vmatprep.subr.bf16.mxu0 0
        %1187 = vmatpush1.bf16.msra.mxu0 0
        %1188 = vmatprep.subr.bf16.mxu0 0
        %1189 = vmatpush1.bf16.msra.mxu0 0
        %1190 = vmatprep.subr.bf16.mxu0 0
        %1191 = vmatpush1.bf16.msra.mxu0 0
        %1192 = vmatprep.subr.bf16.mxu0 0
        %1193 = vmatpush1.bf16.msra.mxu0 0
        %1194 = vmatprep.subr.bf16.mxu0 0
        %1195 = vmatpush1.bf16.msra.mxu0 0
        %1196 = vmatprep.subr.bf16.mxu0 0
        %1197 = vmatpush1.bf16.msra.mxu0 0
        %1198 = vmatprep.subr.bf16.mxu0 0
        %1199 = vmatpush1.bf16.msra.mxu0 0
        %1200 = vmatprep.subr.bf16.mxu0 0
        %1201 = vmatpush1.bf16.msra.mxu0 0
        %1202 = vmatprep.subr.bf16.mxu0 0
        %1203 = vmatpush1.bf16.msra.mxu0 0
        %1204 = vmatprep.subr.bf16.mxu0 0
        %1205 = vmatpush1.bf16.msra.mxu0 0
        %1206 = vmatprep.subr.bf16.mxu0 0
        %1207 = vmatpush1.bf16.msra.mxu0 0
        %1208 = vmatprep.subr.bf16.mxu0 0
        %1209 = vmatpush1.bf16.msra.mxu0 0
        %1210 = vmatprep.subr.bf16.mxu0 0
        %1211 = vmatpush1.bf16.msra.mxu0 0
        %1212 = vmatprep.mubr.bf16.mxu0 0
        %1213 = vmatmul.mubr.bf16.gmra.mrb[0].mxu0 %v1166
        %v1214 = vpop.f32.mrb[0].mxu0
        %v1215 = vadd.f32 0.0, %v1214
        %v1216 = vpop.f32.mrb[0].mxu0
        %v1217 = vpop.f32.mrb[0].mxu0
        %v1218 = vadd.f32 0.0, %v1217
        %v1219 = vpop.f32.mrb[0].mxu0
        %1220 = vmatprep.mubr.bf16.mxu0 0
        %1221 = vmatmul.mubr.bf16.gmra.mrb[0].mxu0 %v1169
        %v1222 = vpop.f32.mrb[0].mxu0
        %v1223 = vadd.f32 0.0, %v1222
        %v1224 = vpop.f32.mrb[0].mxu0
        %v1225 = vpop.f32.mrb[0].mxu0
        %v1226 = vadd.f32 0.0, %v1225
        %v1227 = vpop.f32.mrb[0].mxu0
        %1228 = vmatprep.mubr.bf16.mxu0 0
        %1229 = vmatmul.mubr.bf16.gmra.mrb[0].mxu0 %v1172
        %v1230 = vpop.f32.mrb[0].mxu0
        %v1231 = vadd.f32 0.0, %v1230
        %v1232 = vpop.f32.mrb[0].mxu0
        %v1233 = vpop.f32.mrb[0].mxu0
        %v1234 = vadd.f32 0.0, %v1233
        %v1235 = vpop.f32.mrb[0].mxu0
        %1236 = vmatprep.mubr.bf16.mxu0 0
        %1237 = vmatmul.mubr.bf16.gmra.mrb[0].mxu0 %v1175
        %v1238 = vpop.f32.mrb[0].mxu0
        %v1239 = vadd.f32 0.0, %v1238
        %v1240 = vpop.f32.mrb[0].mxu0
        %v1241 = vpop.f32.mrb[0].mxu0
        %v1242 = vadd.f32 0.0, %v1241
        %v1243 = vpop.f32.mrb[0].mxu0
        %1244 = vdwg.mxu0
        %v1246 = vsel %vm768, %v1150, 0
        %1248 = vmatprep.subr.bf16.mxu0 0
        %1249 = vmatpush1.bf16.msra.mxu0 %v1246
        %1250 = vmatprep.subr.bf16.mxu0 0
        %1251 = vmatpush1.bf16.msra.mxu0 0
        %1252 = vmatprep.subr.bf16.mxu0 0
        %1253 = vmatpush1.bf16.msra.mxu0 0
        %1254 = vmatprep.subr.bf16.mxu0 0
        %1255 = vmatpush1.bf16.msra.mxu0 0
        %1256 = vmatprep.subr.bf16.mxu0 0
        %1257 = vmatpush1.bf16.msra.mxu0 0
        %1258 = vmatprep.subr.bf16.mxu0 0
        %1259 = vmatpush1.bf16.msra.mxu0 0
        %1260 = vmatprep.subr.bf16.mxu0 0
        %1261 = vmatpush1.bf16.msra.mxu0 0
        %1262 = vmatprep.subr.bf16.mxu0 0
        %1263 = vmatpush1.bf16.msra.mxu0 0
        %1264 = vmatprep.subr.bf16.mxu0 0
        %1265 = vmatpush1.bf16.msra.mxu0 0
        %1266 = vmatprep.subr.bf16.mxu0 0
        %1267 = vmatpush1.bf16.msra.mxu0 0
        %1268 = vmatprep.subr.bf16.mxu0 0
        %1269 = vmatpush1.bf16.msra.mxu0 0
        %1270 = vmatprep.subr.bf16.mxu0 0
        %1271 = vmatpush1.bf16.msra.mxu0 0
        %1272 = vmatprep.subr.bf16.mxu0 0
        %1273 = vmatpush1.bf16.msra.mxu0 0
        %1274 = vmatprep.subr.bf16.mxu0 0
        %1275 = vmatpush1.bf16.msra.mxu0 0
        %1276 = vmatprep.subr.bf16.mxu0 0
        %1277 = vmatpush1.bf16.msra.mxu0 0
        %1278 = vmatprep.subr.bf16.mxu0 0
        %1279 = vmatpush1.bf16.msra.mxu0 0
        %1280 = vmatprep.mubr.bf16.mxu0 0
        %1281 = vmatmul.mubr.bf16.gmra.mrb[0].mxu0 %v757
        %v1282 = vpop.f32.mrb[0].mxu0
        %v1283 = vadd.f32 %v1215, %v1282
        %v1284 = vpop.f32.mrb[0].mxu0
        %v1285 = vpop.f32.mrb[0].mxu0
        %v1286 = vadd.f32 %v1218, %v1285
        %v1287 = vpop.f32.mrb[0].mxu0
        %1288 = vmatprep.mubr.bf16.mxu0 0
        %1289 = vmatmul.mubr.bf16.gmra.mrb[0].mxu0 %v760
        %v1290 = vpop.f32.mrb[0].mxu0
        %v1291 = vadd.f32 %v1223, %v1290
        %v1292 = vpop.f32.mrb[0].mxu0
        %v1293 = vpop.f32.mrb[0].mxu0
        %v1294 = vadd.f32 %v1226, %v1293
        %v1295 = vpop.f32.mrb[0].mxu0
        %1296 = vmatprep.mubr.bf16.mxu0 0
        %1297 = vmatmul.mubr.bf16.gmra.mrb[0].mxu0 %v763
        %v1298 = vpop.f32.mrb[0].mxu0
        %v1299 = vadd.f32 %v1231, %v1298
        %v1300 = vpop.f32.mrb[0].mxu0
        %v1301 = vpop.f32.mrb[0].mxu0
        %v1302 = vadd.f32 %v1234, %v1301
        %v1303 = vpop.f32.mrb[0].mxu0
        %1304 = vmatprep.mubr.bf16.mxu0 0
        %1305 = vmatmul.mubr.bf16.gmra.mrb[0].mxu0 %v766
        %v1306 = vpop.f32.mrb[0].mxu0
        %v1307 = vadd.f32 %v1239, %v1306
        %v1308 = vpop.f32.mrb[0].mxu0
        %v1309 = vpop.f32.mrb[0].mxu0
        %v1310 = vadd.f32 %v1242, %v1309
        %v1311 = vpop.f32.mrb[0].mxu0
        %1312 = vdwg.mxu0
        %s1313 = scalar_lea.vmem %s1, 24
        %v1314 = vld [vmem:[%s1313] sm:$0xf]
        %v1316 = vsel %vm768, %v1314, 0
        %1318 = vmatprep.subr.bf16.mxu0 0
        %1319 = vmatpush1.bf16.msra.mxu0 %v1316
        %1320 = vmatprep.subr.bf16.mxu0 0
        %1321 = vmatpush1.bf16.msra.mxu0 0
        %1322 = vmatprep.subr.bf16.mxu0 0
        %1323 = vmatpush1.bf16.msra.mxu0 0
        %1324 = vmatprep.subr.bf16.mxu0 0
        %1325 = vmatpush1.bf16.msra.mxu0 0
        %1326 = vmatprep.subr.bf16.mxu0 0
        %1327 = vmatpush1.bf16.msra.mxu0 0
        %1328 = vmatprep.subr.bf16.mxu0 0
        %1329 = vmatpush1.bf16.msra.mxu0 0
        %1330 = vmatprep.subr.bf16.mxu0 0
        %1331 = vmatpush1.bf16.msra.mxu0 0
        %1332 = vmatprep.subr.bf16.mxu0 0
        %1333 = vmatpush1.bf16.msra.mxu0 0
        %1334 = vmatprep.subr.bf16.mxu0 0
        %1335 = vmatpush1.bf16.msra.mxu0 0
        %1336 = vmatprep.subr.bf16.mxu0 0
        %1337 = vmatpush1.bf16.msra.mxu0 0
        %1338 = vmatprep.subr.bf16.mxu0 0
        %1339 = vmatpush1.bf16.msra.mxu0 0
        %1340 = vmatprep.subr.bf16.mxu0 0
        %1341 = vmatpush1.bf16.msra.mxu0 0
        %1342 = vmatprep.subr.bf16.mxu0 0
        %1343 = vmatpush1.bf16.msra.mxu0 0
        %1344 = vmatprep.subr.bf16.mxu0 0
        %1345 = vmatpush1.bf16.msra.mxu0 0
        %1346 = vmatprep.subr.bf16.mxu0 0
        %1347 = vmatpush1.bf16.msra.mxu0 0
        %1348 = vmatprep.subr.bf16.mxu0 0
        %1349 = vmatpush1.bf16.msra.mxu0 0
        %1350 = vmatprep.mubr.bf16.mxu0 0
        %1351 = vmatmul.mubr.bf16.gmra.mrb[0].mxu0 %v1062
        %v1352 = vpop.f32.mrb[0].mxu0
        %v1353 = vadd.f32 0.0, %v1352
        %v1354 = vpop.f32.mrb[0].mxu0
        %v1355 = vpop.f32.mrb[0].mxu0
        %v1356 = vadd.f32 0.0, %v1355
        %v1357 = vpop.f32.mrb[0].mxu0
        %1358 = vmatprep.mubr.bf16.mxu0 0
        %1359 = vmatmul.mubr.bf16.gmra.mrb[0].mxu0 %v1065
        %v1360 = vpop.f32.mrb[0].mxu0
        %v1361 = vadd.f32 0.0, %v1360
        %v1362 = vpop.f32.mrb[0].mxu0
        %v1363 = vpop.f32.mrb[0].mxu0
        %v1364 = vadd.f32 0.0, %v1363
        %v1365 = vpop.f32.mrb[0].mxu0
        %1366 = vmatprep.mubr.bf16.mxu0 0
        %1367 = vmatmul.mubr.bf16.gmra.mrb[0].mxu0 %v1068
        %v1368 = vpop.f32.mrb[0].mxu0
        %v1369 = vadd.f32 0.0, %v1368
        %v1370 = vpop.f32.mrb[0].mxu0
        %v1371 = vpop.f32.mrb[0].mxu0
        %v1372 = vadd.f32 0.0, %v1371
        %v1373 = vpop.f32.mrb[0].mxu0
        %1374 = vmatprep.mubr.bf16.mxu0 0
        %1375 = vmatmul.mubr.bf16.gmra.mrb[0].mxu0 %v1071
        %v1376 = vpop.f32.mrb[0].mxu0
        %v1377 = vadd.f32 0.0, %v1376
        %v1378 = vpop.f32.mrb[0].mxu0
        %v1379 = vpop.f32.mrb[0].mxu0
        %v1380 = vadd.f32 0.0, %v1379
        %v1381 = vpop.f32.mrb[0].mxu0
        %1382 = vdwg.mxu0
        %v1383 = vadd.f32 %v1283, %v1353
        %v1384 = vadd.f32 %v1286, %v1356
        %v1385 = vadd.f32 %v1291, %v1361
        %v1386 = vadd.f32 %v1294, %v1364
        %v1387 = vadd.f32 %v1299, %v1369
        %v1388 = vadd.f32 %v1302, %v1372
        %v1389 = vadd.f32 %v1307, %v1377
        %v1390 = vadd.f32 %v1310, %v1380
        %s1391 = scalar_lea.vmem %s1, 16
        %v1392 = vld [vmem:[%s1391] sm:$0xf]
        %v1393 = vunpack.c.l.b16 %v525
        %v1394 = vunpack.c.l.b16 %v529
        %v1395 = vunpack.c.l.b16 %v533
        %v1396 = vunpack.c.l.b16 %v537
        %v1397 = vunpack.c.l.b16 %v541
        %v1398 = vunpack.c.l.b16 %v545
        %v1399 = vunpack.c.l.b16 %v549
        %v1400 = vunpack.c.l.b16 %v553
        %v1401 = vpack.c.b16 %v1394, %v1393
        %v1402 = vpack.c.b16 %v1396, %v1395
        %v1403 = vpack.c.b16 %v1398, %v1397
        %v1404 = vpack.c.b16 %v1400, %v1399
        %v1406 = vsel %vm755, %v1401, 0
        %v1409 = vsel %vm755, %v1402, 0
        %v1412 = vsel %vm755, %v1403, 0
        %v1415 = vsel %vm755, %v1404, 0
        %v1418 = vsel %vm768, %v1392, 0
        %1420 = vmatprep.subr.bf16.mxu0 0
        %1421 = vmatpush1.bf16.msra.mxu0 %v1418
        %1422 = vmatprep.subr.bf16.mxu0 0
        %1423 = vmatpush1.bf16.msra.mxu0 0
        %1424 = vmatprep.subr.bf16.mxu0 0
        %1425 = vmatpush1.bf16.msra.mxu0 0
        %1426 = vmatprep.subr.bf16.mxu0 0
        %1427 = vmatpush1.bf16.msra.mxu0 0
        %1428 = vmatprep.subr.bf16.mxu0 0
        %1429 = vmatpush1.bf16.msra.mxu0 0
        %1430 = vmatprep.subr.bf16.mxu0 0
        %1431 = vmatpush1.bf16.msra.mxu0 0
        %1432 = vmatprep.subr.bf16.mxu0 0
        %1433 = vmatpush1.bf16.msra.mxu0 0
        %1434 = vmatprep.subr.bf16.mxu0 0
        %1435 = vmatpush1.bf16.msra.mxu0 0
        %1436 = vmatprep.subr.bf16.mxu0 0
        %1437 = vmatpush1.bf16.msra.mxu0 0
        %1438 = vmatprep.subr.bf16.mxu0 0
        %1439 = vmatpush1.bf16.msra.mxu0 0
        %1440 = vmatprep.subr.bf16.mxu0 0
        %1441 = vmatpush1.bf16.msra.mxu0 0
        %1442 = vmatprep.subr.bf16.mxu0 0
        %1443 = vmatpush1.bf16.msra.mxu0 0
        %1444 = vmatprep.subr.bf16.mxu0 0
        %1445 = vmatpush1.bf16.msra.mxu0 0
        %1446 = vmatprep.subr.bf16.mxu0 0
        %1447 = vmatpush1.bf16.msra.mxu0 0
        %1448 = vmatprep.subr.bf16.mxu0 0
        %1449 = vmatpush1.bf16.msra.mxu0 0
        %1450 = vmatprep.subr.bf16.mxu0 0
        %1451 = vmatpush1.bf16.msra.mxu0 0
        %1452 = vmatprep.mubr.bf16.mxu0 0
        %1453 = vmatmul.mubr.bf16.gmra.mrb[0].mxu0 %v1406
        %v1454 = vpop.f32.mrb[0].mxu0
        %v1455 = vadd.f32 0.0, %v1454
        %v1456 = vpop.f32.mrb[0].mxu0
        %v1457 = vpop.f32.mrb[0].mxu0
        %v1458 = vadd.f32 0.0, %v1457
        %v1459 = vpop.f32.mrb[0].mxu0
        %1460 = vmatprep.mubr.bf16.mxu0 0
        %1461 = vmatmul.mubr.bf16.gmra.mrb[0].mxu0 %v1409
        %v1462 = vpop.f32.mrb[0].mxu0
        %v1463 = vadd.f32 0.0, %v1462
        %v1464 = vpop.f32.mrb[0].mxu0
        %v1465 = vpop.f32.mrb[0].mxu0
        %v1466 = vadd.f32 0.0, %v1465
        %v1467 = vpop.f32.mrb[0].mxu0
        %1468 = vmatprep.mubr.bf16.mxu0 0
        %1469 = vmatmul.mubr.bf16.gmra.mrb[0].mxu0 %v1412
        %v1470 = vpop.f32.mrb[0].mxu0
        %v1471 = vadd.f32 0.0, %v1470
        %v1472 = vpop.f32.mrb[0].mxu0
        %v1473 = vpop.f32.mrb[0].mxu0
        %v1474 = vadd.f32 0.0, %v1473
        %v1475 = vpop.f32.mrb[0].mxu0
        %1476 = vmatprep.mubr.bf16.mxu0 0
        %1477 = vmatmul.mubr.bf16.gmra.mrb[0].mxu0 %v1415
        %v1478 = vpop.f32.mrb[0].mxu0
        %v1479 = vadd.f32 0.0, %v1478
        %v1480 = vpop.f32.mrb[0].mxu0
        %v1481 = vpop.f32.mrb[0].mxu0
        %v1482 = vadd.f32 0.0, %v1481
        %v1483 = vpop.f32.mrb[0].mxu0
        %1484 = vdwg.mxu0
        %v1485 = vadd.f32 %v1383, %v1455
        %v1486 = vadd.f32 %v1384, %v1458
        %v1487 = vadd.f32 %v1385, %v1463
        %v1488 = vadd.f32 %v1386, %v1466
        %v1489 = vadd.f32 %v1387, %v1471
        %v1490 = vadd.f32 %v1388, %v1474
        %v1491 = vadd.f32 %v1389, %v1479
        %v1492 = vadd.f32 %v1390, %v1482
        %s1493 = scalar_lea.vmem %s1, 44
        %v1494 = vld [vmem:[%s1493] sm:$0xf]
        %s1495 = scalar_lea.vmem %s1, 36
        %v1496 = vld [vmem:[%s1495] sm:$0xf]
        %v1498 = vsel %vm768, %v1496, 0
        %1500 = vmatprep.subr.bf16.mxu0 0
        %1501 = vmatpush1.bf16.msra.mxu0 %v1498
        %1502 = vmatprep.subr.bf16.mxu0 0
        %1503 = vmatpush1.bf16.msra.mxu0 0
        %1504 = vmatprep.subr.bf16.mxu0 0
        %1505 = vmatpush1.bf16.msra.mxu0 0
        %1506 = vmatprep.subr.bf16.mxu0 0
        %1507 = vmatpush1.bf16.msra.mxu0 0
        %1508 = vmatprep.subr.bf16.mxu0 0
        %1509 = vmatpush1.bf16.msra.mxu0 0
        %1510 = vmatprep.subr.bf16.mxu0 0
        %1511 = vmatpush1.bf16.msra.mxu0 0
        %1512 = vmatprep.subr.bf16.mxu0 0
        %1513 = vmatpush1.bf16.msra.mxu0 0
        %1514 = vmatprep.subr.bf16.mxu0 0
        %1515 = vmatpush1.bf16.msra.mxu0 0
        %1516 = vmatprep.subr.bf16.mxu0 0
        %1517 = vmatpush1.bf16.msra.mxu0 0
        %1518 = vmatprep.subr.bf16.mxu0 0
        %1519 = vmatpush1.bf16.msra.mxu0 0
        %1520 = vmatprep.subr.bf16.mxu0 0
        %1521 = vmatpush1.bf16.msra.mxu0 0
        %1522 = vmatprep.subr.bf16.mxu0 0
        %1523 = vmatpush1.bf16.msra.mxu0 0
        %1524 = vmatprep.subr.bf16.mxu0 0
        %1525 = vmatpush1.bf16.msra.mxu0 0
        %1526 = vmatprep.subr.bf16.mxu0 0
        %1527 = vmatpush1.bf16.msra.mxu0 0
        %1528 = vmatprep.subr.bf16.mxu0 0
        %1529 = vmatpush1.bf16.msra.mxu0 0
        %1530 = vmatprep.subr.bf16.mxu0 0
        %1531 = vmatpush1.bf16.msra.mxu0 0
        %1532 = vmatprep.mubr.bf16.mxu0 0
        %1533 = vmatmul.mubr.bf16.gmra.mrb[0].mxu0 %v1062
        %v1534 = vpop.f32.mrb[0].mxu0
        %v1535 = vadd.f32 0.0, %v1534
        %v1536 = vpop.f32.mrb[0].mxu0
        %v1537 = vpop.f32.mrb[0].mxu0
        %v1538 = vadd.f32 0.0, %v1537
        %v1539 = vpop.f32.mrb[0].mxu0
        %1540 = vmatprep.mubr.bf16.mxu0 0
        %1541 = vmatmul.mubr.bf16.gmra.mrb[0].mxu0 %v1065
        %v1542 = vpop.f32.mrb[0].mxu0
        %v1543 = vadd.f32 0.0, %v1542
        %v1544 = vpop.f32.mrb[0].mxu0
        %v1545 = vpop.f32.mrb[0].mxu0
        %v1546 = vadd.f32 0.0, %v1545
        %v1547 = vpop.f32.mrb[0].mxu0
        %1548 = vmatprep.mubr.bf16.mxu0 0
        %1549 = vmatmul.mubr.bf16.gmra.mrb[0].mxu0 %v1068
        %v1550 = vpop.f32.mrb[0].mxu0
        %v1551 = vadd.f32 0.0, %v1550
        %v1552 = vpop.f32.mrb[0].mxu0
        %v1553 = vpop.f32.mrb[0].mxu0
        %v1554 = vadd.f32 0.0, %v1553
        %v1555 = vpop.f32.mrb[0].mxu0
        %1556 = vmatprep.mubr.bf16.mxu0 0
        %1557 = vmatmul.mubr.bf16.gmra.mrb[0].mxu0 %v1071
        %v1558 = vpop.f32.mrb[0].mxu0
        %v1559 = vadd.f32 0.0, %v1558
        %v1560 = vpop.f32.mrb[0].mxu0
        %v1561 = vpop.f32.mrb[0].mxu0
        %v1562 = vadd.f32 0.0, %v1561
        %v1563 = vpop.f32.mrb[0].mxu0
        %1564 = vdwg.mxu0
        %v1566 = vsel %vm768, %v1494, 0
        %1568 = vmatprep.subr.bf16.mxu0 0
        %1569 = vmatpush1.bf16.msra.mxu0 %v1566
        %1570 = vmatprep.subr.bf16.mxu0 0
        %1571 = vmatpush1.bf16.msra.mxu0 0
        %1572 = vmatprep.subr.bf16.mxu0 0
        %1573 = vmatpush1.bf16.msra.mxu0 0
        %1574 = vmatprep.subr.bf16.mxu0 0
        %1575 = vmatpush1.bf16.msra.mxu0 0
        %1576 = vmatprep.subr.bf16.mxu0 0
        %1577 = vmatpush1.bf16.msra.mxu0 0
        %1578 = vmatprep.subr.bf16.mxu0 0
        %1579 = vmatpush1.bf16.msra.mxu0 0
        %1580 = vmatprep.subr.bf16.mxu0 0
        %1581 = vmatpush1.bf16.msra.mxu0 0
        %1582 = vmatprep.subr.bf16.mxu0 0
        %1583 = vmatpush1.bf16.msra.mxu0 0
        %1584 = vmatprep.subr.bf16.mxu0 0
        %1585 = vmatpush1.bf16.msra.mxu0 0
        %1586 = vmatprep.subr.bf16.mxu0 0
        %1587 = vmatpush1.bf16.msra.mxu0 0
        %1588 = vmatprep.subr.bf16.mxu0 0
        %1589 = vmatpush1.bf16.msra.mxu0 0
        %1590 = vmatprep.subr.bf16.mxu0 0
        %1591 = vmatpush1.bf16.msra.mxu0 0
        %1592 = vmatprep.subr.bf16.mxu0 0
        %1593 = vmatpush1.bf16.msra.mxu0 0
        %1594 = vmatprep.subr.bf16.mxu0 0
        %1595 = vmatpush1.bf16.msra.mxu0 0
        %1596 = vmatprep.subr.bf16.mxu0 0
        %1597 = vmatpush1.bf16.msra.mxu0 0
        %1598 = vmatprep.subr.bf16.mxu0 0
        %1599 = vmatpush1.bf16.msra.mxu0 0
        %1600 = vmatprep.mubr.bf16.mxu0 0
        %1601 = vmatmul.mubr.bf16.gmra.mrb[0].mxu0 %v960
        %v1602 = vpop.f32.mrb[0].mxu0
        %v1603 = vadd.f32 %v1535, %v1602
        %v1604 = vpop.f32.mrb[0].mxu0
        %v1605 = vpop.f32.mrb[0].mxu0
        %v1606 = vadd.f32 %v1538, %v1605
        %v1607 = vpop.f32.mrb[0].mxu0
        %1608 = vmatprep.mubr.bf16.mxu0 0
        %1609 = vmatmul.mubr.bf16.gmra.mrb[0].mxu0 %v963
        %v1610 = vpop.f32.mrb[0].mxu0
        %v1611 = vadd.f32 %v1543, %v1610
        %v1612 = vpop.f32.mrb[0].mxu0
        %v1613 = vpop.f32.mrb[0].mxu0
        %v1614 = vadd.f32 %v1546, %v1613
        %v1615 = vpop.f32.mrb[0].mxu0
        %1616 = vmatprep.mubr.bf16.mxu0 0
        %1617 = vmatmul.mubr.bf16.gmra.mrb[0].mxu0 %v966
        %v1618 = vpop.f32.mrb[0].mxu0
        %v1619 = vadd.f32 %v1551, %v1618
        %v1620 = vpop.f32.mrb[0].mxu0
        %v1621 = vpop.f32.mrb[0].mxu0
        %v1622 = vadd.f32 %v1554, %v1621
        %v1623 = vpop.f32.mrb[0].mxu0
        %1624 = vmatprep.mubr.bf16.mxu0 0
        %1625 = vmatmul.mubr.bf16.gmra.mrb[0].mxu0 %v969
        %v1626 = vpop.f32.mrb[0].mxu0
        %v1627 = vadd.f32 %v1559, %v1626
        %v1628 = vpop.f32.mrb[0].mxu0
        %v1629 = vpop.f32.mrb[0].mxu0
        %v1630 = vadd.f32 %v1562, %v1629
        %v1631 = vpop.f32.mrb[0].mxu0
        %1632 = vdwg.mxu0
        %s1633 = scalar_lea.vmem %s1, 12
        %v1634 = vld [vmem:[%s1633] sm:$0xf]
        %v1643 = vunpack.c.l.b16 %v555
        %v1644 = vunpack.c.l.b16 %v556
        %v1645 = vunpack.c.l.b16 %v557
        %v1646 = vunpack.c.l.b16 %v558
        %v1647 = vunpack.c.l.b16 %v559
        %v1648 = vunpack.c.l.b16 %v560
        %v1649 = vunpack.c.l.b16 %v561
        %v1650 = vunpack.c.l.b16 %v562
        %v1651 = vpack.c.b16 %v1644, %v1643
        %v1652 = vpack.c.b16 %v1646, %v1645
        %v1653 = vpack.c.b16 %v1648, %v1647
        %v1654 = vpack.c.b16 %v1650, %v1649
        %v1656 = vsel %vm755, %v1651, 0
        %v1659 = vsel %vm755, %v1652, 0
        %v1662 = vsel %vm755, %v1653, 0
        %v1665 = vsel %vm755, %v1654, 0
        %v1668 = vsel %vm768, %v1634, 0
        %1670 = vmatprep.subr.bf16.mxu0 0
        %1671 = vmatpush1.bf16.msra.mxu0 %v1668
        %1672 = vmatprep.subr.bf16.mxu0 0
        %1673 = vmatpush1.bf16.msra.mxu0 0
        %1674 = vmatprep.subr.bf16.mxu0 0
        %1675 = vmatpush1.bf16.msra.mxu0 0
        %1676 = vmatprep.subr.bf16.mxu0 0
        %1677 = vmatpush1.bf16.msra.mxu0 0
        %1678 = vmatprep.subr.bf16.mxu0 0
        %1679 = vmatpush1.bf16.msra.mxu0 0
        %1680 = vmatprep.subr.bf16.mxu0 0
        %1681 = vmatpush1.bf16.msra.mxu0 0
        %1682 = vmatprep.subr.bf16.mxu0 0
        %1683 = vmatpush1.bf16.msra.mxu0 0
        %1684 = vmatprep.subr.bf16.mxu0 0
        %1685 = vmatpush1.bf16.msra.mxu0 0
        %1686 = vmatprep.subr.bf16.mxu0 0
        %1687 = vmatpush1.bf16.msra.mxu0 0
        %1688 = vmatprep.subr.bf16.mxu0 0
        %1689 = vmatpush1.bf16.msra.mxu0 0
        %1690 = vmatprep.subr.bf16.mxu0 0
        %1691 = vmatpush1.bf16.msra.mxu0 0
        %1692 = vmatprep.subr.bf16.mxu0 0
        %1693 = vmatpush1.bf16.msra.mxu0 0
        %1694 = vmatprep.subr.bf16.mxu0 0
        %1695 = vmatpush1.bf16.msra.mxu0 0
        %1696 = vmatprep.subr.bf16.mxu0 0
        %1697 = vmatpush1.bf16.msra.mxu0 0
        %1698 = vmatprep.subr.bf16.mxu0 0
        %1699 = vmatpush1.bf16.msra.mxu0 0
        %1700 = vmatprep.subr.bf16.mxu0 0
        %1701 = vmatpush1.bf16.msra.mxu0 0
        %1702 = vmatprep.mubr.bf16.mxu0 0
        %1703 = vmatmul.mubr.bf16.gmra.mrb[0].mxu0 %v1656
        %v1704 = vpop.f32.mrb[0].mxu0
        %v1705 = vadd.f32 0.0, %v1704
        %v1706 = vpop.f32.mrb[0].mxu0
        %v1707 = vpop.f32.mrb[0].mxu0
        %v1708 = vadd.f32 0.0, %v1707
        %v1709 = vpop.f32.mrb[0].mxu0
        %1710 = vmatprep.mubr.bf16.mxu0 0
        %1711 = vmatmul.mubr.bf16.gmra.mrb[0].mxu0 %v1659
        %v1712 = vpop.f32.mrb[0].mxu0
        %v1713 = vadd.f32 0.0, %v1712
        %v1714 = vpop.f32.mrb[0].mxu0
        %v1715 = vpop.f32.mrb[0].mxu0
        %v1716 = vadd.f32 0.0, %v1715
        %v1717 = vpop.f32.mrb[0].mxu0
        %1718 = vmatprep.mubr.bf16.mxu0 0
        %1719 = vmatmul.mubr.bf16.gmra.mrb[0].mxu0 %v1662
        %v1720 = vpop.f32.mrb[0].mxu0
        %v1721 = vadd.f32 0.0, %v1720
        %v1722 = vpop.f32.mrb[0].mxu0
        %v1723 = vpop.f32.mrb[0].mxu0
        %v1724 = vadd.f32 0.0, %v1723
        %v1725 = vpop.f32.mrb[0].mxu0
        %1726 = vmatprep.mubr.bf16.mxu0 0
        %1727 = vmatmul.mubr.bf16.gmra.mrb[0].mxu0 %v1665
        %v1728 = vpop.f32.mrb[0].mxu0
        %v1729 = vadd.f32 0.0, %v1728
        %v1730 = vpop.f32.mrb[0].mxu0
        %v1731 = vpop.f32.mrb[0].mxu0
        %v1732 = vadd.f32 0.0, %v1731
        %v1733 = vpop.f32.mrb[0].mxu0
        %1734 = vdwg.mxu0
        %v1735 = vadd.f32 %v1603, %v1705
        %v1736 = vadd.f32 %v1606, %v1708
        %v1737 = vadd.f32 %v1611, %v1713
        %v1738 = vadd.f32 %v1614, %v1716
        %v1739 = vadd.f32 %v1619, %v1721
        %v1740 = vadd.f32 %v1622, %v1724
        %v1741 = vadd.f32 %v1627, %v1729
        %v1742 = vadd.f32 %v1630, %v1732
        %s1743 = scalar_lea.vmem %s1, 4
        %v1744 = vld [vmem:[%s1743] sm:$0xf]
        %v1745 = vunpack.c.l.b16 %v584
        %v1746 = vunpack.c.l.b16 %v598
        %v1747 = vunpack.c.l.b16 %v612
        %v1748 = vunpack.c.l.b16 %v626
        %v1749 = vunpack.c.l.b16 %v640
        %v1750 = vunpack.c.l.b16 %v654
        %v1751 = vunpack.c.l.b16 %v668
        %v1752 = vunpack.c.l.b16 %v682
        %v1753 = vpack.c.b16 %v1746, %v1745
        %v1754 = vpack.c.b16 %v1748, %v1747
        %v1755 = vpack.c.b16 %v1750, %v1749
        %v1756 = vpack.c.b16 %v1752, %v1751
        %v1758 = vsel %vm755, %v1753, 0
        %v1761 = vsel %vm755, %v1754, 0
        %v1764 = vsel %vm755, %v1755, 0
        %v1767 = vsel %vm755, %v1756, 0
        %v1770 = vsel %vm768, %v1744, 0
        %1772 = vmatprep.subr.bf16.mxu0 0
        %1773 = vmatpush1.bf16.msra.mxu0 %v1770
        %1774 = vmatprep.subr.bf16.mxu0 0
        %1775 = vmatpush1.bf16.msra.mxu0 0
        %1776 = vmatprep.subr.bf16.mxu0 0
        %1777 = vmatpush1.bf16.msra.mxu0 0
        %1778 = vmatprep.subr.bf16.mxu0 0
        %1779 = vmatpush1.bf16.msra.mxu0 0
        %1780 = vmatprep.subr.bf16.mxu0 0
        %1781 = vmatpush1.bf16.msra.mxu0 0
        %1782 = vmatprep.subr.bf16.mxu0 0
        %1783 = vmatpush1.bf16.msra.mxu0 0
        %1784 = vmatprep.subr.bf16.mxu0 0
        %1785 = vmatpush1.bf16.msra.mxu0 0
        %1786 = vmatprep.subr.bf16.mxu0 0
        %1787 = vmatpush1.bf16.msra.mxu0 0
        %1788 = vmatprep.subr.bf16.mxu0 0
        %1789 = vmatpush1.bf16.msra.mxu0 0
        %1790 = vmatprep.subr.bf16.mxu0 0
        %1791 = vmatpush1.bf16.msra.mxu0 0
        %1792 = vmatprep.subr.bf16.mxu0 0
        %1793 = vmatpush1.bf16.msra.mxu0 0
        %1794 = vmatprep.subr.bf16.mxu0 0
        %1795 = vmatpush1.bf16.msra.mxu0 0
        %1796 = vmatprep.subr.bf16.mxu0 0
        %1797 = vmatpush1.bf16.msra.mxu0 0
        %1798 = vmatprep.subr.bf16.mxu0 0
        %1799 = vmatpush1.bf16.msra.mxu0 0
        %1800 = vmatprep.subr.bf16.mxu0 0
        %1801 = vmatpush1.bf16.msra.mxu0 0
        %1802 = vmatprep.subr.bf16.mxu0 0
        %1803 = vmatpush1.bf16.msra.mxu0 0
        %1804 = vmatprep.mubr.bf16.mxu0 0
        %1805 = vmatmul.mubr.bf16.gmra.mrb[0].mxu0 %v1758
        %v1806 = vpop.f32.mrb[0].mxu0
        %v1807 = vadd.f32 0.0, %v1806
        %v1808 = vpop.f32.mrb[0].mxu0
        %v1809 = vpop.f32.mrb[0].mxu0
        %v1810 = vadd.f32 0.0, %v1809
        %v1811 = vpop.f32.mrb[0].mxu0
        %1812 = vmatprep.mubr.bf16.mxu0 0
        %1813 = vmatmul.mubr.bf16.gmra.mrb[0].mxu0 %v1761
        %v1814 = vpop.f32.mrb[0].mxu0
        %v1815 = vadd.f32 0.0, %v1814
        %v1816 = vpop.f32.mrb[0].mxu0
        %v1817 = vpop.f32.mrb[0].mxu0
        %v1818 = vadd.f32 0.0, %v1817
        %v1819 = vpop.f32.mrb[0].mxu0
        %1820 = vmatprep.mubr.bf16.mxu0 0
        %1821 = vmatmul.mubr.bf16.gmra.mrb[0].mxu0 %v1764
        %v1822 = vpop.f32.mrb[0].mxu0
        %v1823 = vadd.f32 0.0, %v1822
        %v1824 = vpop.f32.mrb[0].mxu0
        %v1825 = vpop.f32.mrb[0].mxu0
        %v1826 = vadd.f32 0.0, %v1825
        %v1827 = vpop.f32.mrb[0].mxu0
        %1828 = vmatprep.mubr.bf16.mxu0 0
        %1829 = vmatmul.mubr.bf16.gmra.mrb[0].mxu0 %v1767
        %v1830 = vpop.f32.mrb[0].mxu0
        %v1831 = vadd.f32 0.0, %v1830
        %v1832 = vpop.f32.mrb[0].mxu0
        %v1833 = vpop.f32.mrb[0].mxu0
        %v1834 = vadd.f32 0.0, %v1833
        %v1835 = vpop.f32.mrb[0].mxu0
        %1836 = vdwg.mxu0
        %v1837 = vadd.f32 %v1735, %v1807
        %v1838 = vadd.f32 %v1736, %v1810
        %v1839 = vadd.f32 %v1737, %v1815
        %v1840 = vadd.f32 %v1738, %v1818
        %v1841 = vadd.f32 %v1739, %v1823
        %v1842 = vadd.f32 %v1740, %v1826
        %v1843 = vadd.f32 %v1741, %v1831
        %v1844 = vadd.f32 %v1742, %v1834
        %s1845 = scalar_lea.vmem %s1, 40
        %v1846 = vld [vmem:[%s1845] sm:$0xf]
        %s1847 = scalar_lea.vmem %s1, 32
        %v1848 = vld [vmem:[%s1847] sm:$0xf]
        %v1850 = vsel %vm768, %v1848, 0
        %1852 = vmatprep.subr.bf16.mxu0 0
        %1853 = vmatpush1.bf16.msra.mxu0 %v1850
        %1854 = vmatprep.subr.bf16.mxu0 0
        %1855 = vmatpush1.bf16.msra.mxu0 0
        %1856 = vmatprep.subr.bf16.mxu0 0
        %1857 = vmatpush1.bf16.msra.mxu0 0
        %1858 = vmatprep.subr.bf16.mxu0 0
        %1859 = vmatpush1.bf16.msra.mxu0 0
        %1860 = vmatprep.subr.bf16.mxu0 0
        %1861 = vmatpush1.bf16.msra.mxu0 0
        %1862 = vmatprep.subr.bf16.mxu0 0
        %1863 = vmatpush1.bf16.msra.mxu0 0
        %1864 = vmatprep.subr.bf16.mxu0 0
        %1865 = vmatpush1.bf16.msra.mxu0 0
        %1866 = vmatprep.subr.bf16.mxu0 0
        %1867 = vmatpush1.bf16.msra.mxu0 0
        %1868 = vmatprep.subr.bf16.mxu0 0
        %1869 = vmatpush1.bf16.msra.mxu0 0
        %1870 = vmatprep.subr.bf16.mxu0 0
        %1871 = vmatpush1.bf16.msra.mxu0 0
        %1872 = vmatprep.subr.bf16.mxu0 0
        %1873 = vmatpush1.bf16.msra.mxu0 0
        %1874 = vmatprep.subr.bf16.mxu0 0
        %1875 = vmatpush1.bf16.msra.mxu0 0
        %1876 = vmatprep.subr.bf16.mxu0 0
        %1877 = vmatpush1.bf16.msra.mxu0 0
        %1878 = vmatprep.subr.bf16.mxu0 0
        %1879 = vmatpush1.bf16.msra.mxu0 0
        %1880 = vmatprep.subr.bf16.mxu0 0
        %1881 = vmatpush1.bf16.msra.mxu0 0
        %1882 = vmatprep.subr.bf16.mxu0 0
        %1883 = vmatpush1.bf16.msra.mxu0 0
        %1884 = vmatprep.mubr.bf16.mxu0 0
        %1885 = vmatmul.mubr.bf16.gmra.mrb[0].mxu0 %v1406
        %v1886 = vpop.f32.mrb[0].mxu0
        %v1887 = vadd.f32 0.0, %v1886
        %v1888 = vpop.f32.mrb[0].mxu0
        %v1889 = vpop.f32.mrb[0].mxu0
        %v1890 = vadd.f32 0.0, %v1889
        %v1891 = vpop.f32.mrb[0].mxu0
        %1892 = vmatprep.mubr.bf16.mxu0 0
        %1893 = vmatmul.mubr.bf16.gmra.mrb[0].mxu0 %v1409
        %v1894 = vpop.f32.mrb[0].mxu0
        %v1895 = vadd.f32 0.0, %v1894
        %v1896 = vpop.f32.mrb[0].mxu0
        %v1897 = vpop.f32.mrb[0].mxu0
        %v1898 = vadd.f32 0.0, %v1897
        %v1899 = vpop.f32.mrb[0].mxu0
        %1900 = vmatprep.mubr.bf16.mxu0 0
        %1901 = vmatmul.mubr.bf16.gmra.mrb[0].mxu0 %v1412
        %v1902 = vpop.f32.mrb[0].mxu0
        %v1903 = vadd.f32 0.0, %v1902
        %v1904 = vpop.f32.mrb[0].mxu0
        %v1905 = vpop.f32.mrb[0].mxu0
        %v1906 = vadd.f32 0.0, %v1905
        %v1907 = vpop.f32.mrb[0].mxu0
        %1908 = vmatprep.mubr.bf16.mxu0 0
        %1909 = vmatmul.mubr.bf16.gmra.mrb[0].mxu0 %v1415
        %v1910 = vpop.f32.mrb[0].mxu0
        %v1911 = vadd.f32 0.0, %v1910
        %v1912 = vpop.f32.mrb[0].mxu0
        %v1913 = vpop.f32.mrb[0].mxu0
        %v1914 = vadd.f32 0.0, %v1913
        %v1915 = vpop.f32.mrb[0].mxu0
        %1916 = vdwg.mxu0
        %v1918 = vsel %vm768, %v1846, 0
        %1920 = vmatprep.subr.bf16.mxu0 0
        %1921 = vmatpush1.bf16.msra.mxu0 %v1918
        %1922 = vmatprep.subr.bf16.mxu0 0
        %1923 = vmatpush1.bf16.msra.mxu0 0
        %1924 = vmatprep.subr.bf16.mxu0 0
        %1925 = vmatpush1.bf16.msra.mxu0 0
        %1926 = vmatprep.subr.bf16.mxu0 0
        %1927 = vmatpush1.bf16.msra.mxu0 0
        %1928 = vmatprep.subr.bf16.mxu0 0
        %1929 = vmatpush1.bf16.msra.mxu0 0
        %1930 = vmatprep.subr.bf16.mxu0 0
        %1931 = vmatpush1.bf16.msra.mxu0 0
        %1932 = vmatprep.subr.bf16.mxu0 0
        %1933 = vmatpush1.bf16.msra.mxu0 0
        %1934 = vmatprep.subr.bf16.mxu0 0
        %1935 = vmatpush1.bf16.msra.mxu0 0
        %1936 = vmatprep.subr.bf16.mxu0 0
        %1937 = vmatpush1.bf16.msra.mxu0 0
        %1938 = vmatprep.subr.bf16.mxu0 0
        %1939 = vmatpush1.bf16.msra.mxu0 0
        %1940 = vmatprep.subr.bf16.mxu0 0
        %1941 = vmatpush1.bf16.msra.mxu0 0
        %1942 = vmatprep.subr.bf16.mxu0 0
        %1943 = vmatpush1.bf16.msra.mxu0 0
        %1944 = vmatprep.subr.bf16.mxu0 0
        %1945 = vmatpush1.bf16.msra.mxu0 0
        %1946 = vmatprep.subr.bf16.mxu0 0
        %1947 = vmatpush1.bf16.msra.mxu0 0
        %1948 = vmatprep.subr.bf16.mxu0 0
        %1949 = vmatpush1.bf16.msra.mxu0 0
        %1950 = vmatprep.subr.bf16.mxu0 0
        %1951 = vmatpush1.bf16.msra.mxu0 0
        %1952 = vmatprep.mubr.bf16.mxu0 0
        %1953 = vmatmul.mubr.bf16.gmra.mrb[0].mxu0 %v1062
        %v1954 = vpop.f32.mrb[0].mxu0
        %v1955 = vadd.f32 %v1887, %v1954
        %v1956 = vpop.f32.mrb[0].mxu0
        %v1957 = vpop.f32.mrb[0].mxu0
        %v1958 = vadd.f32 %v1890, %v1957
        %v1959 = vpop.f32.mrb[0].mxu0
        %1960 = vmatprep.mubr.bf16.mxu0 0
        %1961 = vmatmul.mubr.bf16.gmra.mrb[0].mxu0 %v1065
        %v1962 = vpop.f32.mrb[0].mxu0
        %v1963 = vadd.f32 %v1895, %v1962
        %v1964 = vpop.f32.mrb[0].mxu0
        %v1965 = vpop.f32.mrb[0].mxu0
        %v1966 = vadd.f32 %v1898, %v1965
        %v1967 = vpop.f32.mrb[0].mxu0
        %1968 = vmatprep.mubr.bf16.mxu0 0
        %1969 = vmatmul.mubr.bf16.gmra.mrb[0].mxu0 %v1068
        %v1970 = vpop.f32.mrb[0].mxu0
        %v1971 = vadd.f32 %v1903, %v1970
        %v1972 = vpop.f32.mrb[0].mxu0
        %v1973 = vpop.f32.mrb[0].mxu0
        %v1974 = vadd.f32 %v1906, %v1973
        %v1975 = vpop.f32.mrb[0].mxu0
        %1976 = vmatprep.mubr.bf16.mxu0 0
        %1977 = vmatmul.mubr.bf16.gmra.mrb[0].mxu0 %v1071
        %v1978 = vpop.f32.mrb[0].mxu0
        %v1979 = vadd.f32 %v1911, %v1978
        %v1980 = vpop.f32.mrb[0].mxu0
        %v1981 = vpop.f32.mrb[0].mxu0
        %v1982 = vadd.f32 %v1914, %v1981
        %v1983 = vpop.f32.mrb[0].mxu0
        %1984 = vdwg.mxu0
        %s1985 = scalar_lea.vmem %s1, 8
        %v1986 = vld [vmem:[%s1985] sm:$0xf]
        %v1988 = vsel %vm768, %v1986, 0
        %1990 = vmatprep.subr.bf16.mxu0 0
        %1991 = vmatpush1.bf16.msra.mxu0 %v1988
        %1992 = vmatprep.subr.bf16.mxu0 0
        %1993 = vmatpush1.bf16.msra.mxu0 0
        %1994 = vmatprep.subr.bf16.mxu0 0
        %1995 = vmatpush1.bf16.msra.mxu0 0
        %1996 = vmatprep.subr.bf16.mxu0 0
        %1997 = vmatpush1.bf16.msra.mxu0 0
        %1998 = vmatprep.subr.bf16.mxu0 0
        %1999 = vmatpush1.bf16.msra.mxu0 0
        %2000 = vmatprep.subr.bf16.mxu0 0
        %2001 = vmatpush1.bf16.msra.mxu0 0
        %2002 = vmatprep.subr.bf16.mxu0 0
        %2003 = vmatpush1.bf16.msra.mxu0 0
        %2004 = vmatprep.subr.bf16.mxu0 0
        %2005 = vmatpush1.bf16.msra.mxu0 0
        %2006 = vmatprep.subr.bf16.mxu0 0
        %2007 = vmatpush1.bf16.msra.mxu0 0
        %2008 = vmatprep.subr.bf16.mxu0 0
        %2009 = vmatpush1.bf16.msra.mxu0 0
        %2010 = vmatprep.subr.bf16.mxu0 0
        %2011 = vmatpush1.bf16.msra.mxu0 0
        %2012 = vmatprep.subr.bf16.mxu0 0
        %2013 = vmatpush1.bf16.msra.mxu0 0
        %2014 = vmatprep.subr.bf16.mxu0 0
        %2015 = vmatpush1.bf16.msra.mxu0 0
        %2016 = vmatprep.subr.bf16.mxu0 0
        %2017 = vmatpush1.bf16.msra.mxu0 0
        %2018 = vmatprep.subr.bf16.mxu0 0
        %2019 = vmatpush1.bf16.msra.mxu0 0
        %2020 = vmatprep.subr.bf16.mxu0 0
        %2021 = vmatpush1.bf16.msra.mxu0 0
        %2022 = vmatprep.mubr.bf16.mxu0 0
        %2023 = vmatmul.mubr.bf16.gmra.mrb[0].mxu0 %v1758
        %v2024 = vpop.f32.mrb[0].mxu0
        %v2025 = vadd.f32 0.0, %v2024
        %v2026 = vpop.f32.mrb[0].mxu0
        %v2027 = vpop.f32.mrb[0].mxu0
        %v2028 = vadd.f32 0.0, %v2027
        %v2029 = vpop.f32.mrb[0].mxu0
        %2030 = vmatprep.mubr.bf16.mxu0 0
        %2031 = vmatmul.mubr.bf16.gmra.mrb[0].mxu0 %v1761
        %v2032 = vpop.f32.mrb[0].mxu0
        %v2033 = vadd.f32 0.0, %v2032
        %v2034 = vpop.f32.mrb[0].mxu0
        %v2035 = vpop.f32.mrb[0].mxu0
        %v2036 = vadd.f32 0.0, %v2035
        %v2037 = vpop.f32.mrb[0].mxu0
        %2038 = vmatprep.mubr.bf16.mxu0 0
        %2039 = vmatmul.mubr.bf16.gmra.mrb[0].mxu0 %v1764
        %v2040 = vpop.f32.mrb[0].mxu0
        %v2041 = vadd.f32 0.0, %v2040
        %v2042 = vpop.f32.mrb[0].mxu0
        %v2043 = vpop.f32.mrb[0].mxu0
        %v2044 = vadd.f32 0.0, %v2043
        %v2045 = vpop.f32.mrb[0].mxu0
        %2046 = vmatprep.mubr.bf16.mxu0 0
        %2047 = vmatmul.mubr.bf16.gmra.mrb[0].mxu0 %v1767
        %v2048 = vpop.f32.mrb[0].mxu0
        %v2049 = vadd.f32 0.0, %v2048
        %v2050 = vpop.f32.mrb[0].mxu0
        %v2051 = vpop.f32.mrb[0].mxu0
        %v2052 = vadd.f32 0.0, %v2051
        %v2053 = vpop.f32.mrb[0].mxu0
        %2054 = vdwg.mxu0
        %v2055 = vadd.f32 %v1955, %v2025
        %v2056 = vadd.f32 %v1958, %v2028
        %v2057 = vadd.f32 %v1963, %v2033
        %v2058 = vadd.f32 %v1966, %v2036
        %v2059 = vadd.f32 %v1971, %v2041
        %v2060 = vadd.f32 %v1974, %v2044
        %v2061 = vadd.f32 %v1979, %v2049
        %v2062 = vadd.f32 %v1982, %v2052
        %v2063 = vld [vmem:[%s1] sm:$0xf]
        %v2064 = vunpack.c.l.b16 %v710
        %v2065 = vunpack.c.l.b16 %v714
        %v2066 = vunpack.c.l.b16 %v718
        %v2067 = vunpack.c.l.b16 %v722
        %v2068 = vunpack.c.l.b16 %v726
        %v2069 = vunpack.c.l.b16 %v730
        %v2070 = vunpack.c.l.b16 %v734
        %v2071 = vunpack.c.l.b16 %v738
        %v2072 = vpack.c.b16 %v2065, %v2064
        %v2073 = vpack.c.b16 %v2067, %v2066
        %v2074 = vpack.c.b16 %v2069, %v2068
        %v2075 = vpack.c.b16 %v2071, %v2070
        %v2077 = vsel %vm755, %v2072, 0
        %v2080 = vsel %vm755, %v2073, 0
        %v2083 = vsel %vm755, %v2074, 0
        %v2086 = vsel %vm755, %v2075, 0
        %v2089 = vsel %vm768, %v2063, 0
        %2091 = vmatprep.subr.bf16.mxu0 0
        %2092 = vmatpush1.bf16.msra.mxu0 %v2089
        %2093 = vmatprep.subr.bf16.mxu0 0
        %2094 = vmatpush1.bf16.msra.mxu0 0
        %2095 = vmatprep.subr.bf16.mxu0 0
        %2096 = vmatpush1.bf16.msra.mxu0 0
        %2097 = vmatprep.subr.bf16.mxu0 0
        %2098 = vmatpush1.bf16.msra.mxu0 0
        %2099 = vmatprep.subr.bf16.mxu0 0
        %2100 = vmatpush1.bf16.msra.mxu0 0
        %2101 = vmatprep.subr.bf16.mxu0 0
        %2102 = vmatpush1.bf16.msra.mxu0 0
        %2103 = vmatprep.subr.bf16.mxu0 0
        %2104 = vmatpush1.bf16.msra.mxu0 0
        %2105 = vmatprep.subr.bf16.mxu0 0
        %2106 = vmatpush1.bf16.msra.mxu0 0
        %2107 = vmatprep.subr.bf16.mxu0 0
        %2108 = vmatpush1.bf16.msra.mxu0 0
        %2109 = vmatprep.subr.bf16.mxu0 0
        %2110 = vmatpush1.bf16.msra.mxu0 0
        %2111 = vmatprep.subr.bf16.mxu0 0
        %2112 = vmatpush1.bf16.msra.mxu0 0
        %2113 = vmatprep.subr.bf16.mxu0 0
        %2114 = vmatpush1.bf16.msra.mxu0 0
        %2115 = vmatprep.subr.bf16.mxu0 0
        %2116 = vmatpush1.bf16.msra.mxu0 0
        %2117 = vmatprep.subr.bf16.mxu0 0
        %2118 = vmatpush1.bf16.msra.mxu0 0
        %2119 = vmatprep.subr.bf16.mxu0 0
        %2120 = vmatpush1.bf16.msra.mxu0 0
        %2121 = vmatprep.subr.bf16.mxu0 0
        %2122 = vmatpush1.bf16.msra.mxu0 0
        %2123 = vmatprep.mubr.bf16.mxu0 0
        %2124 = vmatmul.mubr.bf16.gmra.mrb[0].mxu0 %v2077
        %v2125 = vpop.f32.mrb[0].mxu0
        %v2126 = vadd.f32 0.0, %v2125
        %v2127 = vpop.f32.mrb[0].mxu0
        %v2128 = vpop.f32.mrb[0].mxu0
        %v2129 = vadd.f32 0.0, %v2128
        %v2130 = vpop.f32.mrb[0].mxu0
        %2131 = vmatprep.mubr.bf16.mxu0 0
        %2132 = vmatmul.mubr.bf16.gmra.mrb[0].mxu0 %v2080
        %v2133 = vpop.f32.mrb[0].mxu0
        %v2134 = vadd.f32 0.0, %v2133
        %v2135 = vpop.f32.mrb[0].mxu0
        %v2136 = vpop.f32.mrb[0].mxu0
        %v2137 = vadd.f32 0.0, %v2136
        %v2138 = vpop.f32.mrb[0].mxu0
        %2139 = vmatprep.mubr.bf16.mxu0 0
        %2140 = vmatmul.mubr.bf16.gmra.mrb[0].mxu0 %v2083
        %v2141 = vpop.f32.mrb[0].mxu0
        %v2142 = vadd.f32 0.0, %v2141
        %v2143 = vpop.f32.mrb[0].mxu0
        %v2144 = vpop.f32.mrb[0].mxu0
        %v2145 = vadd.f32 0.0, %v2144
        %v2146 = vpop.f32.mrb[0].mxu0
        %2147 = vmatprep.mubr.bf16.mxu0 0
        %2148 = vmatmul.mubr.bf16.gmra.mrb[0].mxu0 %v2086
        %v2149 = vpop.f32.mrb[0].mxu0
        %v2150 = vadd.f32 0.0, %v2149
        %v2151 = vpop.f32.mrb[0].mxu0
        %v2152 = vpop.f32.mrb[0].mxu0
        %v2153 = vadd.f32 0.0, %v2152
        %v2154 = vpop.f32.mrb[0].mxu0
        %2155 = vdwg.mxu0
        %v2156 = vadd.f32 %v2055, %v2126
        %v2157 = vadd.f32 %v2056, %v2129
        %v2158 = vadd.f32 %v2057, %v2134
        %v2159 = vadd.f32 %v2058, %v2137
        %v2160 = vadd.f32 %v2059, %v2142
        %v2161 = vadd.f32 %v2060, %v2145
        %v2162 = vadd.f32 %v2061, %v2150
        %v2163 = vadd.f32 %v2062, %v2153
        %2172 = vrot.lane.b32.xlu0 %v1485, 8
        %v2173 = vpop.permute.xlu0 %2172
        %2174 = vrot.lane.b32.xlu0 %v1486, 8
        %v2175 = vpop.permute.xlu0 %2174
        %2176 = vrot.lane.b32.xlu0 %v1487, 8
        %v2177 = vpop.permute.xlu0 %2176
        %2178 = vrot.lane.b32.xlu0 %v1488, 8
        %v2179 = vpop.permute.xlu0 %2178
        %2180 = vrot.lane.b32.xlu0 %v1489, 8
        %v2181 = vpop.permute.xlu0 %2180
        %2182 = vrot.lane.b32.xlu0 %v1490, 8
        %v2183 = vpop.permute.xlu0 %2182
        %2184 = vrot.lane.b32.xlu0 %v1491, 8
        %v2185 = vpop.permute.xlu0 %2184
        %2186 = vrot.lane.b32.xlu0 %v1492, 8
        %v2187 = vpop.permute.xlu0 %2186
        %2204 = vrot.lane.b32.xlu0 %v1837, 16
        %v2205 = vpop.permute.xlu0 %2204
        %2206 = vrot.lane.b32.xlu0 %v1838, 16
        %v2207 = vpop.permute.xlu0 %2206
        %2208 = vrot.lane.b32.xlu0 %v1839, 16
        %v2209 = vpop.permute.xlu0 %2208
        %2210 = vrot.lane.b32.xlu0 %v1840, 16
        %v2211 = vpop.permute.xlu0 %2210
        %2212 = vrot.lane.b32.xlu0 %v1841, 16
        %v2213 = vpop.permute.xlu0 %2212
        %2214 = vrot.lane.b32.xlu0 %v1842, 16
        %v2215 = vpop.permute.xlu0 %2214
        %2216 = vrot.lane.b32.xlu0 %v1843, 16
        %v2217 = vpop.permute.xlu0 %2216
        %2218 = vrot.lane.b32.xlu0 %v1844, 16
        %v2219 = vpop.permute.xlu0 %2218
        %2236 = vrot.lane.b32.xlu0 %v2156, 24
        %v2237 = vpop.permute.xlu0 %2236
        %2238 = vrot.lane.b32.xlu0 %v2157, 24
        %v2239 = vpop.permute.xlu0 %2238
        %2240 = vrot.lane.b32.xlu0 %v2158, 24
        %v2241 = vpop.permute.xlu0 %2240
        %2242 = vrot.lane.b32.xlu0 %v2159, 24
        %v2243 = vpop.permute.xlu0 %2242
        %2244 = vrot.lane.b32.xlu0 %v2160, 24
        %v2245 = vpop.permute.xlu0 %2244
        %2246 = vrot.lane.b32.xlu0 %v2161, 24
        %v2247 = vpop.permute.xlu0 %2246
        %2248 = vrot.lane.b32.xlu0 %v2162, 24
        %v2249 = vpop.permute.xlu0 %2248
        %2250 = vrot.lane.b32.xlu0 %v2163, 24
        %v2251 = vpop.permute.xlu0 %2250
        %v2260 = vsel %vm755, %v1141, %v2173
        %v2261 = vsel %vm755, %v1142, %v2175
        %v2262 = vsel %vm755, %v1143, %v2177
        %v2263 = vsel %vm755, %v1144, %v2179
        %v2264 = vsel %vm755, %v1145, %v2181
        %v2265 = vsel %vm755, %v1146, %v2183
        %v2266 = vsel %vm755, %v1147, %v2185
        %v2267 = vsel %vm755, %v1148, %v2187
        %vm2268 = vcmask 130048
        %v2269 = vsel %vm2268, %v2260, %v2205
        %v2270 = vsel %vm2268, %v2261, %v2207
        %v2271 = vsel %vm2268, %v2262, %v2209
        %v2272 = vsel %vm2268, %v2263, %v2211
        %v2273 = vsel %vm2268, %v2264, %v2213
        %v2274 = vsel %vm2268, %v2265, %v2215
        %v2275 = vsel %vm2268, %v2266, %v2217
        %v2276 = vsel %vm2268, %v2267, %v2219
        %vm2277 = vcmask 195584
        %v2278 = vsel %vm2277, %v2269, %v2237
        %v2279 = vsel %vm2277, %v2270, %v2239
        %v2280 = vsel %vm2277, %v2271, %v2241
        %v2281 = vsel %vm2277, %v2272, %v2243
        %v2282 = vsel %vm2277, %v2273, %v2245
        %v2283 = vsel %vm2277, %v2274, %v2247
        %v2284 = vsel %vm2277, %v2275, %v2249
        %v2285 = vsel %vm2277, %v2276, %v2251
        %vm2286 = vcmask 261120
        %v2287 = vsel %vm2286, %v2278, 0.0
        %v2288 = vsel %vm2286, %v2279, 0.0
        %v2289 = vadd.f32 %v2287, %v2288
        %v2290 = vsel %vm2286, %v2280, 0.0
        %v2291 = vadd.f32 %v2289, %v2290
        %v2292 = vsel %vm2286, %v2281, 0.0
        %v2293 = vadd.f32 %v2291, %v2292
        %v2294 = vsel %vm2286, %v2282, 0.0
        %v2295 = vadd.f32 %v2293, %v2294
        %v2296 = vsel %vm2286, %v2283, 0.0
        %v2297 = vadd.f32 %v2295, %v2296
        %v2298 = vsel %vm2286, %v2284, 0.0
        %v2299 = vadd.f32 %v2297, %v2298
        %v2300 = vsel %vm2286, %v2285, 0.0
        %v2301 = vadd.f32 %v2299, %v2300
        %v2302 = vrot.slane %v2301, 4
        %v2303 = vadd.f32 %v2301, %v2302
        %v2304 = vrot.slane %v2303, 2
        %v2305 = vadd.f32 %v2303, %v2304
        %v2306 = vrot.slane %v2305, 1
        %v2307 = vadd.f32 %v2305, %v2306
        %vm2308 = vcmask 253952
        %2309 = vst.msk [vmem:[%s166] sm:$0x1] %vm2308, %v2307
        %v2310 = vmul.f32 %v2278, %v2278
        %v2311 = vmul.f32 %v2279, %v2279
        %v2312 = vmul.f32 %v2280, %v2280
        %v2313 = vmul.f32 %v2281, %v2281
        %v2314 = vmul.f32 %v2282, %v2282
        %v2315 = vmul.f32 %v2283, %v2283
        %v2316 = vmul.f32 %v2284, %v2284
        %v2317 = vmul.f32 %v2285, %v2285
        %v2318 = vsel %vm2286, %v2310, 0.0
        %v2319 = vsel %vm2286, %v2311, 0.0
        %v2320 = vadd.f32 %v2318, %v2319
        %v2321 = vsel %vm2286, %v2312, 0.0
        %v2322 = vadd.f32 %v2320, %v2321
        %v2323 = vsel %vm2286, %v2313, 0.0
        %v2324 = vadd.f32 %v2322, %v2323
        %v2325 = vsel %vm2286, %v2314, 0.0
        %v2326 = vadd.f32 %v2324, %v2325
        %v2327 = vsel %vm2286, %v2315, 0.0
        %v2328 = vadd.f32 %v2326, %v2327
        %v2329 = vsel %vm2286, %v2316, 0.0
        %v2330 = vadd.f32 %v2328, %v2329
        %v2331 = vsel %vm2286, %v2317, 0.0
        %v2332 = vadd.f32 %v2330, %v2331
        %v2333 = vrot.slane %v2332, 4
        %v2334 = vadd.f32 %v2332, %v2333
        %v2335 = vrot.slane %v2334, 2
        %v2336 = vadd.f32 %v2334, %v2335
        %v2337 = vrot.slane %v2336, 1
        %v2338 = vadd.f32 %v2336, %v2337
        %2339 = vst.msk [vmem:[%s172] sm:$0x1] %vm2308, %v2338
        %s2340 = sand.u32 %s76, 1
        %s2341 = scalar_lea.sflag [#allocation3], %s2340
        %s2342 = sand.u32 %s76, 1
        %s2343 = scalar_lea.vmem [#allocation2], %s2342
        %s2344 = sand.u32 %s102, 1
        %s2345 = scalar_lea.sflag [#allocation5], %s2344
        %s2346 = sand.u32 %s102, 1
        %s2347 = scalar_lea.vmem [#allocation4], %s2346
        // Predicated region
        $region29: #{tpu_custom_call.1} parent=27 // pred_check
          %p2348 = pneg %p86
        $region30: #{tpu_custom_call.1} parent=27 // pred_check_branch
          %2350 = sbr.rel (%p2348) target = $region32
        $region31: #{tpu_custom_call.1} parent=27 // pred_region
          %s2352 = ssub.s32 16, 16
          %2353 = vsyncadd %s2341, %s2352
          %s2354 = smul.addr %s21, 16
          %s2355 = scalar_lea.hbm %s2, %s2354
          %s2357 = sshll.u32 %s2343, 4
          %s2358 = int_to_ptr.vmem [resolvable:$true] %s2357
          %2360 = dma.vmem_to_hbm [thread:$0]  %s2358, 16, %s2355, %s2341
        $region32: #{tpu_custom_call.1} parent=27 // pred_fallthru
          _
        // Predicated region
        $region33: #{tpu_custom_call.1} parent=27 // pred_check
          %p2361 = pneg %p112
        $region34: #{tpu_custom_call.1} parent=27 // pred_check_branch
          %2363 = sbr.rel (%p2361) target = $region36
        $region35: #{tpu_custom_call.1} parent=27 // pred_region
          %s2365 = ssub.s32 16, 16
          %2366 = vsyncadd %s2345, %s2365
          %s2367 = smul.addr %s21, 16
          %s2368 = scalar_lea.hbm %s3, %s2367
          %s2370 = sshll.u32 %s2347, 4
          %s2371 = int_to_ptr.vmem [resolvable:$true] %s2370
          %2373 = dma.vmem_to_hbm [thread:$0]  %s2371, 16, %s2368, %s2345
        $region36: #{tpu_custom_call.1} parent=27 // pred_fallthru
          _
      $region28: #{tpu_custom_call.1} parent=5 // pred_fallthru
        _
      %p2374 = scmp.le.s32.totalorder 2, %s16
      // Predicated region
      $region37: #{tpu_custom_call.1} parent=5 // pred_check
        %p2375 = pneg %p2374
      $region38: #{tpu_custom_call.1} parent=5 // pred_check_branch
        %2377 = sbr.rel (%p2375) target = $region40
      $region39: #{tpu_custom_call.1} parent=5 // pred_region
        %s2378 = ssub.s32 %s16, 2
        // Predicated region
        $region41: #{tpu_custom_call.1} parent=39 // pred_check
          %p2379 = pneg %p92
        $region42: #{tpu_custom_call.1} parent=39 // pred_check_branch
          %2381 = sbr.rel (%p2379) target = $region44
        $region43: #{tpu_custom_call.1} parent=39 // pred_region
          %s2382 = sand.u32 %s77, 1
          %s2383 = scalar_lea.sflag [#allocation3], %s2382
          %s2384 = sand.u32 %s77, 1
          %s2385 = scalar_lea.vmem [#allocation2], %s2384
          %2386 = dma.done %s2383, 16
        $region44: #{tpu_custom_call.1} parent=39 // pred_fallthru
          _
        // Predicated region
        $region45: #{tpu_custom_call.1} parent=39 // pred_check
          %p2387 = pneg %p118
        $region46: #{tpu_custom_call.1} parent=39 // pred_check_branch
          %2389 = sbr.rel (%p2387) target = $region48
        $region47: #{tpu_custom_call.1} parent=39 // pred_region
          %s2390 = sand.u32 %s103, 1
          %s2391 = scalar_lea.sflag [#allocation5], %s2390
          %s2392 = sand.u32 %s103, 1
          %s2393 = scalar_lea.vmem [#allocation4], %s2392
          %2394 = dma.done %s2391, 16
        $region48: #{tpu_custom_call.1} parent=39 // pred_fallthru
          _
      $region40: #{tpu_custom_call.1} parent=5 // pred_fallthru
        _
    $region6: #{tpu_custom_call.1} parent=1 // loop_footer
      %s20 = sadd.s32 1, %s16
    $region7: #{tpu_custom_call.1} parent=1 // loop_footer_branch
      %15 = sbr.rel target = $region3
    $region8: #{tpu_custom_call.1} parent=1 // loop_exit
      _
    %2395 = vsyncpa [#allocation3], 1
    %s2396 = scalar_lea.sflag [#allocation3], 1
    %2397 = vsyncpa %s2396, 1
    %2398 = vsyncpa [#allocation5], 1
    %s2399 = scalar_lea.sflag [#allocation5], 1
    %2400 = vsyncpa %s2399, 1

</llo_original>
